<compile_context>
chip_gen: v7x
topology: tpu7x:2x2x1
jax: 0.10.0
libtpu: 0.0.40
codegen_flags: <defaults>
</compile_context>

<pallas_src>
import functools
import math

import jax
import jax.numpy as jnp
import numpy as np
from jax.experimental import pallas as pl
from jax.experimental.pallas import tpu as pltpu

# Model hyper-parameters (small, consistent with a transformer encoder layer).
D_MODEL = 32
N_HEAD = 4
D_HEAD = D_MODEL // N_HEAD
D_FF = 64
NUM_LAYERS = 2
EPS = 1e-5


def _layer_norm(x, gamma, beta):
    mu = jnp.mean(x, axis=-1, keepdims=True)
    var = jnp.mean((x - mu) ** 2, axis=-1, keepdims=True)
    return (x - mu) * jax.lax.rsqrt(var + EPS) * gamma + beta


def encoder_stack_kernel(x_ref, wqkv_ref, bqkv_ref, wo_ref, w1_ref, b1_ref, w2_ref,
                         vecs_ref, o_ref, *, seq, num_layers):
    """Runs all `num_layers` identical encoder layers on one batch element (S, D)."""
    S = seq
    x = x_ref[...].astype(jnp.float32)                      # (S, D), f32

    # bf16 weights (MXU-native input rate; f32 accumulation via preferred_element_type)
    wqkv = wqkv_ref[...]                                    # (D, 3D)  bf16, Q-scaled
    wo = wo_ref[...]                                        # (D, D)   bf16
    w1 = w1_ref[...]                                        # (D, FF)  bf16
    w2 = w2_ref[...]                                        # (FF, D)  bf16

    # Hoisted f32 broadcasts (JAX does not CSE broadcast_in_dim across the
    # unrolled layer loop).
    bqkv = jnp.broadcast_to(bqkv_ref[...], (S, 3 * D_MODEL))   # Q-scaled
    b1 = jnp.broadcast_to(b1_ref[...], (S, D_FF))
    vecs = vecs_ref[...]                                    # (6, D): bo,b2,g1,be1,g2,be2
    bo = jnp.broadcast_to(vecs[0:1], (S, D_MODEL))
    b2 = jnp.broadcast_to(vecs[1:2], (S, D_MODEL))
    g1 = jnp.broadcast_to(vecs[2:3], (S, D_MODEL))
    be1 = jnp.broadcast_to(vecs[3:4], (S, D_MODEL))
    g2 = jnp.broadcast_to(vecs[4:5], (S, D_MODEL))
    be2 = jnp.broadcast_to(vecs[5:6], (S, D_MODEL))

    # Deep-copied layers share identical weights -> reuse the same params each iter.
    # num_layers is tiny (2), so a static unrolled loop is fine.
    for _ in range(num_layers):
        # --- fused QKV projection (scale already folded into the Q columns) ---
        qkv = jnp.dot(x.astype(jnp.bfloat16), wqkv,
                      preferred_element_type=jnp.float32) + bqkv       # (S, 3D) f32

        # --- head split: one reshape + one transpose ---
        # (S, 3D) -> (S, 3H, Dh) -> (3H, S, Dh); leading index: [q heads | k | v]
        qkvh = qkv.reshape(S, 3 * N_HEAD, D_HEAD).transpose(1, 0, 2)
        qh = qkvh[:N_HEAD].astype(jnp.bfloat16)                        # (H, S, Dh)
        kh = qkvh[N_HEAD:2 * N_HEAD].astype(jnp.bfloat16)
        vh = qkvh[2 * N_HEAD:].astype(jnp.bfloat16)

        # --- batched multi-head attention (batch dim = head) ---
        s = jnp.einsum('hqd,hkd->hqk', qh, kh,
                       preferred_element_type=jnp.float32)             # (H, S, S)
        s = s - jnp.max(s, axis=-1, keepdims=True)
        p = jnp.exp(s)
        p = p * pl.reciprocal(jnp.sum(p, axis=-1, keepdims=True), approx=False)
        a = jnp.einsum('hqk,hkd->hqd', p.astype(jnp.bfloat16), vh,
                       preferred_element_type=jnp.float32)             # (H, S, Dh)

        # --- head merge: one transpose + one reshape ---
        attn = a.transpose(1, 0, 2).reshape(S, D_MODEL)                # (S, D)
        attn = jnp.dot(attn.astype(jnp.bfloat16), wo,
                       preferred_element_type=jnp.float32) + bo

        # residual + LayerNorm 1 (post-norm), f32
        x = _layer_norm(x + attn, g1, be1)

        # --- feed-forward ---
        h1 = jnp.maximum(
            jnp.dot(x.astype(jnp.bfloat16), w1, preferred_element_type=jnp.float32) + b1,
            0.0)
        h2 = jnp.dot(h1.astype(jnp.bfloat16), w2,
                     preferred_element_type=jnp.float32) + b2

        # residual + LayerNorm 2
        x = _layer_norm(x + h2, g2, be2)

    o_ref[...] = x.astype(o_ref.dtype)


@functools.partial(jax.jit, static_argnames=("num_layers",))
def transformer_encoder_pallas(x, params, num_layers=NUM_LAYERS):
    (wq, bq, wk, bk, wv, bv, wo, bo, w1, b1, w2, b2, g1, be1, g2, be2) = params
    B, S, D = x.shape
    scale = 1.0 / math.sqrt(D_HEAD)

    # Host-side (jit-fused) packing:
    #  - fused QKV weight/bias with the attention scale folded into the Q columns
    #  - bf16 copies of the matmul weights (MXU operands)
    #  - one (6, D) slab for the remaining per-feature vectors
    wqkv = jnp.concatenate([wq * scale, wk, wv], axis=1).astype(jnp.bfloat16)  # (D, 3D)
    bqkv = jnp.concatenate([bq * scale, bk, bv], axis=1)                       # (1, 3D) f32
    wo_b = wo.astype(jnp.bfloat16)
    w1_b = w1.astype(jnp.bfloat16)
    w2_b = w2.astype(jnp.bfloat16)
    vecs = jnp.concatenate([bo, b2, g1, be1, g2, be2], axis=0)                 # (6, D) f32

    kernel = functools.partial(encoder_stack_kernel, seq=S, num_layers=num_layers)
    out = pl.pallas_call(
        kernel,
        out_shape=jax.ShapeDtypeStruct((B, S, D), x.dtype),
        # Grid over batch: shards batch elements across TensorCores on v7x,
        # neutral on v5e/v6e. Weights use constant index maps -> loaded once.
        grid=(B,),
        in_specs=[
            pl.BlockSpec((None, S, D), lambda b: (b, 0, 0)),        # x (squeezed batch)
            pl.BlockSpec((D, 3 * D), lambda b: (0, 0)),             # wqkv
            pl.BlockSpec((1, 3 * D), lambda b: (0, 0)),             # bqkv
            pl.BlockSpec((D, D), lambda b: (0, 0)),                 # wo
            pl.BlockSpec((D, D_FF), lambda b: (0, 0)),              # w1
            pl.BlockSpec((1, D_FF), lambda b: (0, 0)),              # b1
            pl.BlockSpec((D_FF, D), lambda b: (0, 0)),              # w2
            pl.BlockSpec((6, D), lambda b: (0, 0)),                 # vecs
        ],
        out_specs=pl.BlockSpec((None, S, D), lambda b: (b, 0, 0)),
        compiler_params=pltpu.CompilerParams(dimension_semantics=("parallel",)),
    )(x, wqkv, bqkv, wo_b, w1_b, b1, w2_b, vecs)
    return out


# ---------------- pure-JAX reference (for correctness check) ----------------
def encoder_layer_ref(x, params):
    (wq, bq, wk, bk, wv, bv, wo, bo, w1, b1, w2, b2, g1, be1, g2, be2) = params
    xf = x.astype(jnp.float32)
    q = xf @ wq + bq
    k = xf @ wk + bk
    v = xf @ wv + bv
    B, S, D = x.shape
    qh = q.reshape(B, S, N_HEAD, D_HEAD).transpose(0, 2, 1, 3)
    kh = k.reshape(B, S, N_HEAD, D_HEAD).transpose(0, 2, 1, 3)
    vh = v.reshape(B, S, N_HEAD, D_HEAD).transpose(0, 2, 1, 3)
    s = jnp.einsum("bhsd,bhtd->bhst", qh, kh) / math.sqrt(D_HEAD)
    p = jax.nn.softmax(s, axis=-1)
    a = jnp.einsum("bhst,bhtd->bhsd", p, vh).transpose(0, 2, 1, 3).reshape(B, S, D)
    a = a @ wo + bo
    x1 = _layer_norm(xf + a, g1, be1)
    h = jnp.maximum(x1 @ w1 + b1, 0.0) @ w2 + b2
    return _layer_norm(x1 + h, g2, be2).astype(x.dtype)


def transformer_encoder_ref(x, params, num_layers=NUM_LAYERS):
    out = x
    for _ in range(num_layers):
        out = encoder_layer_ref(out, params)
    return out


def make_params(key):
    ks = jax.random.split(key, 12)

    def w(k, shape, scale=0.1):
        return (scale * jax.random.normal(k, shape)).astype(jnp.float32)

    wq = w(ks[0], (D_MODEL, D_MODEL)); bq = w(ks[1], (1, D_MODEL), 0.02)
    wk = w(ks[2], (D_MODEL, D_MODEL)); bk = w(ks[3], (1, D_MODEL), 0.02)
    wv = w(ks[4], (D_MODEL, D_MODEL)); bv = w(ks[5], (1, D_MODEL), 0.02)
    wo = w(ks[6], (D_MODEL, D_MODEL)); bo = w(ks[7], (1, D_MODEL), 0.02)
    w1 = w(ks[8], (D_MODEL, D_FF));    b1 = w(ks[9], (1, D_FF), 0.02)
    w2 = w(ks[10], (D_FF, D_MODEL));   b2 = w(ks[11], (1, D_MODEL), 0.02)
    g1 = jnp.ones((1, D_MODEL), jnp.float32); be1 = jnp.zeros((1, D_MODEL), jnp.float32)
    g2 = jnp.ones((1, D_MODEL), jnp.float32); be2 = jnp.zeros((1, D_MODEL), jnp.float32)
    return (wq, bq, wk, bk, wv, bv, wo, bo, w1, b1, w2, b2, g1, be1, g2, be2)


if __name__ == "__main__":
    key = jax.random.PRNGKey(0)
    k_x, k_p = jax.random.split(key)
    B, S = 2, 8
    x = jax.random.normal(k_x, (B, S, D_MODEL), dtype=jnp.float32)
    params = make_params(k_p)

    # TODO(synk): dropout of the torch TransformerEncoderLayer is omitted (eval-mode semantics).
    out = transformer_encoder_pallas(x, params)
    out = jax.block_until_ready(out)

    ref = transformer_encoder_ref(x, params)
    # Tolerance reflects bf16 MXU operands (f32 accumulation); softmax reciprocal is exact.
    np.testing.assert_allclose(np.asarray(out), np.asarray(ref), rtol=2e-2, atol=2e-2)

    print("KERNEL_OK")
</pallas_src>

<mosaic_0001>
module attributes {stable_mosaic.version = 11 : i64} {
  func.func @encoder_stack_kernel(%arg0: i32, %arg1: memref<1x8x32xf32, #tpu.memory_space<vmem>>, %arg2: memref<32x96xbf16, #tpu.memory_space<vmem>>, %arg3: memref<1x96xf32, #tpu.memory_space<vmem>>, %arg4: memref<32x32xbf16, #tpu.memory_space<vmem>>, %arg5: memref<32x64xbf16, #tpu.memory_space<vmem>>, %arg6: memref<1x64xf32, #tpu.memory_space<vmem>>, %arg7: memref<64x32xbf16, #tpu.memory_space<vmem>>, %arg8: memref<6x32xf32, #tpu.memory_space<vmem>>, %arg9: memref<1x8x32xf32, #tpu.memory_space<vmem>>) attributes {dimension_semantics = [#tpu.dimension_semantics<parallel>], iteration_bounds = array<i64: 2>, scalar_prefetch = 0 : i64, scratch_operands = 0 : i64, tpu.core_type = #tpu.core_type<tc>, window_params = [{transform_indices = @transform_0, window_bounds = array<i64: 1, 8, 32>}, {pipeline_mode = #tpu.pipeline_mode<synchronous>, transform_indices = @transform_1, window_bounds = array<i64: 32, 96>}, {pipeline_mode = #tpu.pipeline_mode<synchronous>, transform_indices = @transform_2, window_bounds = array<i64: 1, 96>}, {pipeline_mode = #tpu.pipeline_mode<synchronous>, transform_indices = @transform_3, window_bounds = array<i64: 32, 32>}, {pipeline_mode = #tpu.pipeline_mode<synchronous>, transform_indices = @transform_4, window_bounds = array<i64: 32, 64>}, {pipeline_mode = #tpu.pipeline_mode<synchronous>, transform_indices = @transform_5, window_bounds = array<i64: 1, 64>}, {pipeline_mode = #tpu.pipeline_mode<synchronous>, transform_indices = @transform_6, window_bounds = array<i64: 64, 32>}, {pipeline_mode = #tpu.pipeline_mode<synchronous>, transform_indices = @transform_7, window_bounds = array<i64: 6, 32>}, {transform_indices = @transform_8, window_bounds = array<i64: 1, 8, 32>}]} {
    %c0 = arith.constant 0 : index
    %c0_0 = arith.constant 0 : index
    %c0_1 = arith.constant 0 : index
    %0 = vector.load %arg1[%c0, %c0_0, %c0_1] : memref<1x8x32xf32, #tpu.memory_space<vmem>>, vector<1x8x32xf32>
    %1 = vector.shape_cast %0 : vector<1x8x32xf32> to vector<8x32xf32>
    %c0_2 = arith.constant 0 : index
    %c0_3 = arith.constant 0 : index
    %2 = vector.load %arg2[%c0_2, %c0_3] : memref<32x96xbf16, #tpu.memory_space<vmem>>, vector<32x96xbf16>
    %c0_4 = arith.constant 0 : index
    %c0_5 = arith.constant 0 : index
    %3 = vector.load %arg4[%c0_4, %c0_5] : memref<32x32xbf16, #tpu.memory_space<vmem>>, vector<32x32xbf16>
    %c0_6 = arith.constant 0 : index
    %c0_7 = arith.constant 0 : index
    %4 = vector.load %arg5[%c0_6, %c0_7] : memref<32x64xbf16, #tpu.memory_space<vmem>>, vector<32x64xbf16>
    %c0_8 = arith.constant 0 : index
    %c0_9 = arith.constant 0 : index
    %5 = vector.load %arg7[%c0_8, %c0_9] : memref<64x32xbf16, #tpu.memory_space<vmem>>, vector<64x32xbf16>
    %c0_10 = arith.constant 0 : index
    %c0_11 = arith.constant 0 : index
    %6 = vector.load %arg3[%c0_10, %c0_11] : memref<1x96xf32, #tpu.memory_space<vmem>>, vector<1x96xf32>
    %7 = vector.shape_cast %6 : vector<1x96xf32> to vector<1x96xf32>
    %8 = vector.broadcast %7 : vector<1x96xf32> to vector<8x96xf32>
    %c0_12 = arith.constant 0 : index
    %c0_13 = arith.constant 0 : index
    %9 = vector.load %arg6[%c0_12, %c0_13] : memref<1x64xf32, #tpu.memory_space<vmem>>, vector<1x64xf32>
    %10 = vector.shape_cast %9 : vector<1x64xf32> to vector<1x64xf32>
    %11 = vector.broadcast %10 : vector<1x64xf32> to vector<8x64xf32>
    %c0_14 = arith.constant 0 : index
    %c0_15 = arith.constant 0 : index
    %12 = vector.load %arg8[%c0_14, %c0_15] : memref<6x32xf32, #tpu.memory_space<vmem>>, vector<6x32xf32>
    %13 = vector.extract_strided_slice %12 {offsets = [0, 0], sizes = [1, 32], strides = [1, 1]} : vector<6x32xf32> to vector<1x32xf32>
    %14 = vector.shape_cast %13 : vector<1x32xf32> to vector<1x32xf32>
    %15 = vector.broadcast %14 : vector<1x32xf32> to vector<8x32xf32>
    %16 = vector.extract_strided_slice %12 {offsets = [1, 0], sizes = [1, 32], strides = [1, 1]} : vector<6x32xf32> to vector<1x32xf32>
    %17 = vector.shape_cast %16 : vector<1x32xf32> to vector<1x32xf32>
    %18 = vector.broadcast %17 : vector<1x32xf32> to vector<8x32xf32>
    %19 = vector.extract_strided_slice %12 {offsets = [2, 0], sizes = [1, 32], strides = [1, 1]} : vector<6x32xf32> to vector<1x32xf32>
    %20 = vector.shape_cast %19 : vector<1x32xf32> to vector<1x32xf32>
    %21 = vector.broadcast %20 : vector<1x32xf32> to vector<8x32xf32>
    %22 = vector.extract_strided_slice %12 {offsets = [3, 0], sizes = [1, 32], strides = [1, 1]} : vector<6x32xf32> to vector<1x32xf32>
    %23 = vector.shape_cast %22 : vector<1x32xf32> to vector<1x32xf32>
    %24 = vector.broadcast %23 : vector<1x32xf32> to vector<8x32xf32>
    %25 = vector.extract_strided_slice %12 {offsets = [4, 0], sizes = [1, 32], strides = [1, 1]} : vector<6x32xf32> to vector<1x32xf32>
    %26 = vector.shape_cast %25 : vector<1x32xf32> to vector<1x32xf32>
    %27 = vector.broadcast %26 : vector<1x32xf32> to vector<8x32xf32>
    %28 = vector.extract_strided_slice %12 {offsets = [5, 0], sizes = [1, 32], strides = [1, 1]} : vector<6x32xf32> to vector<1x32xf32>
    %29 = vector.shape_cast %28 : vector<1x32xf32> to vector<1x32xf32>
    %30 = vector.broadcast %29 : vector<1x32xf32> to vector<8x32xf32>
    %31 = arith.truncf %1 : vector<8x32xf32> to vector<8x32xbf16>
    %cst = arith.constant dense<0.000000e+00> : vector<8x96xf32>
    %32 = tpu.matmul %31, %2, %cst {dimension_numbers = #tpu.dot_dimension_numbers<[1], [0], [0], [1], [0, 0, 1, 1], [], []>} : vector<8x32xbf16>, vector<32x96xbf16>, vector<8x96xf32> -> vector<8x96xf32>
    %33 = arith.addf %32, %8 : vector<8x96xf32>
    %34 = vector.shape_cast %33 : vector<8x96xf32> to vector<8x12x8xf32>
    %35 = tpu.transpose %34, [1, 0, 2] : vector<8x12x8xf32> -> vector<12x8x8xf32>
    %36 = vector.extract_strided_slice %35 {offsets = [0, 0, 0], sizes = [4, 8, 8], strides = [1, 1, 1]} : vector<12x8x8xf32> to vector<4x8x8xf32>
    %37 = arith.truncf %36 : vector<4x8x8xf32> to vector<4x8x8xbf16>
    %38 = vector.extract_strided_slice %35 {offsets = [4, 0, 0], sizes = [4, 8, 8], strides = [1, 1, 1]} : vector<12x8x8xf32> to vector<4x8x8xf32>
    %39 = arith.truncf %38 : vector<4x8x8xf32> to vector<4x8x8xbf16>
    %40 = vector.extract_strided_slice %35 {offsets = [8, 0, 0], sizes = [4, 8, 8], strides = [1, 1, 1]} : vector<12x8x8xf32> to vector<4x8x8xf32>
    %41 = arith.truncf %40 : vector<4x8x8xf32> to vector<4x8x8xbf16>
    "tpu.trace_start"() <{level = 10 : i32, message = "hqd,hkd->hqk"}> : () -> ()
    %cst_16 = arith.constant dense<0.000000e+00> : vector<4x8x8xf32>
    %42 = tpu.matmul %37, %39, %cst_16 {dimension_numbers = #tpu.dot_dimension_numbers<[2], [2], [1], [1], [0, 0, 0, 1, 1, 1], [0], [0]>} : vector<4x8x8xbf16>, vector<4x8x8xbf16>, vector<4x8x8xf32> -> vector<4x8x8xf32>
    "tpu.trace_stop"() : () -> ()
    %cst_17 = arith.constant dense<0xFF800000> : vector<4x8xf32>
    %43 = vector.multi_reduction <maximumf>, %42, %cst_17 [2] : vector<4x8x8xf32> to vector<4x8xf32>
    %44 = vector.shape_cast %43 : vector<4x8xf32> to vector<4x8x1xf32>
    %45 = vector.broadcast %44 : vector<4x8x1xf32> to vector<4x8x8xf32>
    %46 = arith.subf %42, %45 : vector<4x8x8xf32>
    %47 = math.exp %46 : vector<4x8x8xf32>
    %cst_18 = arith.constant dense<0.000000e+00> : vector<4x8xf32>
    %48 = vector.multi_reduction <add>, %47, %cst_18 [2] : vector<4x8x8xf32> to vector<4x8xf32>
    %49 = vector.shape_cast %48 : vector<4x8xf32> to vector<4x8x1xf32>
    %50 = tpu.reciprocal %49 : vector<4x8x1xf32> -> vector<4x8x1xf32>
    %51 = vector.broadcast %50 : vector<4x8x1xf32> to vector<4x8x8xf32>
    %52 = arith.mulf %47, %51 : vector<4x8x8xf32>
    %53 = arith.truncf %52 : vector<4x8x8xf32> to vector<4x8x8xbf16>
    "tpu.trace_start"() <{level = 10 : i32, message = "hqk,hkd->hqd"}> : () -> ()
    %cst_19 = arith.constant dense<0.000000e+00> : vector<4x8x8xf32>
    %54 = tpu.matmul %53, %41, %cst_19 {dimension_numbers = #tpu.dot_dimension_numbers<[2], [1], [1], [2], [0, 0, 0, 1, 1, 2], [0], [0]>} : vector<4x8x8xbf16>, vector<4x8x8xbf16>, vector<4x8x8xf32> -> vector<4x8x8xf32>
    "tpu.trace_stop"() : () -> ()
    %55 = tpu.transpose %54, [1, 0, 2] : vector<4x8x8xf32> -> vector<8x4x8xf32>
    %56 = vector.shape_cast %55 : vector<8x4x8xf32> to vector<8x32xf32>
    %57 = arith.truncf %56 : vector<8x32xf32> to vector<8x32xbf16>
    %cst_20 = arith.constant dense<0.000000e+00> : vector<8x32xf32>
    %58 = tpu.matmul %57, %3, %cst_20 {dimension_numbers = #tpu.dot_dimension_numbers<[1], [0], [0], [1], [0, 0, 1, 1], [], []>} : vector<8x32xbf16>, vector<32x32xbf16>, vector<8x32xf32> -> vector<8x32xf32>
    %59 = arith.addf %58, %15 : vector<8x32xf32>
    %60 = arith.addf %1, %59 : vector<8x32xf32>
    %cst_21 = arith.constant dense<0.000000e+00> : vector<8xf32>
    %61 = vector.multi_reduction <add>, %60, %cst_21 [1] : vector<8x32xf32> to vector<8xf32>
    %62 = vector.shape_cast %61 : vector<8xf32> to vector<8x1xf32>
    %cst_22 = arith.constant 3.200000e+01 : f32
    %63 = vector.broadcast %cst_22 : f32 to vector<8x1xf32>
    %64 = arith.divf %62, %63 : vector<8x1xf32>
    %65 = vector.broadcast %64 : vector<8x1xf32> to vector<8x32xf32>
    %66 = arith.subf %60, %65 : vector<8x32xf32>
    %67 = arith.mulf %66, %66 : vector<8x32xf32>
    %cst_23 = arith.constant dense<0.000000e+00> : vector<8xf32>
    %68 = vector.multi_reduction <add>, %67, %cst_23 [1] : vector<8x32xf32> to vector<8xf32>
    %69 = vector.shape_cast %68 : vector<8xf32> to vector<8x1xf32>
    %cst_24 = arith.constant 3.200000e+01 : f32
    %70 = vector.broadcast %cst_24 : f32 to vector<8x1xf32>
    %71 = arith.divf %69, %70 : vector<8x1xf32>
    %72 = vector.broadcast %64 : vector<8x1xf32> to vector<8x32xf32>
    %73 = arith.subf %60, %72 : vector<8x32xf32>
    %cst_25 = arith.constant 9.99999974E-6 : f32
    %74 = vector.broadcast %cst_25 : f32 to vector<8x1xf32>
    %75 = arith.addf %71, %74 : vector<8x1xf32>
    %76 = math.rsqrt %75 : vector<8x1xf32>
    %77 = vector.broadcast %76 : vector<8x1xf32> to vector<8x32xf32>
    %78 = arith.mulf %73, %77 : vector<8x32xf32>
    %79 = arith.mulf %78, %21 : vector<8x32xf32>
    %80 = arith.addf %79, %24 : vector<8x32xf32>
    %81 = arith.truncf %80 : vector<8x32xf32> to vector<8x32xbf16>
    %cst_26 = arith.constant dense<0.000000e+00> : vector<8x64xf32>
    %82 = tpu.matmul %81, %4, %cst_26 {dimension_numbers = #tpu.dot_dimension_numbers<[1], [0], [0], [1], [0, 0, 1, 1], [], []>} : vector<8x32xbf16>, vector<32x64xbf16>, vector<8x64xf32> -> vector<8x64xf32>
    %83 = arith.addf %82, %11 : vector<8x64xf32>
    %cst_27 = arith.constant 0.000000e+00 : f32
    %84 = vector.broadcast %cst_27 : f32 to vector<8x64xf32>
    %85 = arith.maximumf %83, %84 : vector<8x64xf32>
    %86 = arith.truncf %85 : vector<8x64xf32> to vector<8x64xbf16>
    %cst_28 = arith.constant dense<0.000000e+00> : vector<8x32xf32>
    %87 = tpu.matmul %86, %5, %cst_28 {dimension_numbers = #tpu.dot_dimension_numbers<[1], [0], [0], [1], [0, 0, 1, 1], [], []>} : vector<8x64xbf16>, vector<64x32xbf16>, vector<8x32xf32> -> vector<8x32xf32>
    %88 = arith.addf %87, %18 : vector<8x32xf32>
    %89 = arith.addf %80, %88 : vector<8x32xf32>
    %cst_29 = arith.constant dense<0.000000e+00> : vector<8xf32>
    %90 = vector.multi_reduction <add>, %89, %cst_29 [1] : vector<8x32xf32> to vector<8xf32>
    %91 = vector.shape_cast %90 : vector<8xf32> to vector<8x1xf32>
    %cst_30 = arith.constant 3.200000e+01 : f32
    %92 = vector.broadcast %cst_30 : f32 to vector<8x1xf32>
    %93 = arith.divf %91, %92 : vector<8x1xf32>
    %94 = vector.broadcast %93 : vector<8x1xf32> to vector<8x32xf32>
    %95 = arith.subf %89, %94 : vector<8x32xf32>
    %96 = arith.mulf %95, %95 : vector<8x32xf32>
    %cst_31 = arith.constant dense<0.000000e+00> : vector<8xf32>
    %97 = vector.multi_reduction <add>, %96, %cst_31 [1] : vector<8x32xf32> to vector<8xf32>
    %98 = vector.shape_cast %97 : vector<8xf32> to vector<8x1xf32>
    %cst_32 = arith.constant 3.200000e+01 : f32
    %99 = vector.broadcast %cst_32 : f32 to vector<8x1xf32>
    %100 = arith.divf %98, %99 : vector<8x1xf32>
    %101 = vector.broadcast %93 : vector<8x1xf32> to vector<8x32xf32>
    %102 = arith.subf %89, %101 : vector<8x32xf32>
    %cst_33 = arith.constant 9.99999974E-6 : f32
    %103 = vector.broadcast %cst_33 : f32 to vector<8x1xf32>
    %104 = arith.addf %100, %103 : vector<8x1xf32>
    %105 = math.rsqrt %104 : vector<8x1xf32>
    %106 = vector.broadcast %105 : vector<8x1xf32> to vector<8x32xf32>
    %107 = arith.mulf %102, %106 : vector<8x32xf32>
    %108 = arith.mulf %107, %27 : vector<8x32xf32>
    %109 = arith.addf %108, %30 : vector<8x32xf32>
    %110 = arith.truncf %109 : vector<8x32xf32> to vector<8x32xbf16>
    %cst_34 = arith.constant dense<0.000000e+00> : vector<8x96xf32>
    %111 = tpu.matmul %110, %2, %cst_34 {dimension_numbers = #tpu.dot_dimension_numbers<[1], [0], [0], [1], [0, 0, 1, 1], [], []>} : vector<8x32xbf16>, vector<32x96xbf16>, vector<8x96xf32> -> vector<8x96xf32>
    %112 = arith.addf %111, %8 : vector<8x96xf32>
    %113 = vector.shape_cast %112 : vector<8x96xf32> to vector<8x12x8xf32>
    %114 = tpu.transpose %113, [1, 0, 2] : vector<8x12x8xf32> -> vector<12x8x8xf32>
    %115 = vector.extract_strided_slice %114 {offsets = [0, 0, 0], sizes = [4, 8, 8], strides = [1, 1, 1]} : vector<12x8x8xf32> to vector<4x8x8xf32>
    %116 = arith.truncf %115 : vector<4x8x8xf32> to vector<4x8x8xbf16>
    %117 = vector.extract_strided_slice %114 {offsets = [4, 0, 0], sizes = [4, 8, 8], strides = [1, 1, 1]} : vector<12x8x8xf32> to vector<4x8x8xf32>
    %118 = arith.truncf %117 : vector<4x8x8xf32> to vector<4x8x8xbf16>
    %119 = vector.extract_strided_slice %114 {offsets = [8, 0, 0], sizes = [4, 8, 8], strides = [1, 1, 1]} : vector<12x8x8xf32> to vector<4x8x8xf32>
    %120 = arith.truncf %119 : vector<4x8x8xf32> to vector<4x8x8xbf16>
    "tpu.trace_start"() <{level = 10 : i32, message = "hqd,hkd->hqk"}> : () -> ()
    %cst_35 = arith.constant dense<0.000000e+00> : vector<4x8x8xf32>
    %121 = tpu.matmul %116, %118, %cst_35 {dimension_numbers = #tpu.dot_dimension_numbers<[2], [2], [1], [1], [0, 0, 0, 1, 1, 1], [0], [0]>} : vector<4x8x8xbf16>, vector<4x8x8xbf16>, vector<4x8x8xf32> -> vector<4x8x8xf32>
    "tpu.trace_stop"() : () -> ()
    %cst_36 = arith.constant dense<0xFF800000> : vector<4x8xf32>
    %122 = vector.multi_reduction <maximumf>, %121, %cst_36 [2] : vector<4x8x8xf32> to vector<4x8xf32>
    %123 = vector.shape_cast %122 : vector<4x8xf32> to vector<4x8x1xf32>
    %124 = vector.broadcast %123 : vector<4x8x1xf32> to vector<4x8x8xf32>
    %125 = arith.subf %121, %124 : vector<4x8x8xf32>
    %126 = math.exp %125 : vector<4x8x8xf32>
    %cst_37 = arith.constant dense<0.000000e+00> : vector<4x8xf32>
    %127 = vector.multi_reduction <add>, %126, %cst_37 [2] : vector<4x8x8xf32> to vector<4x8xf32>
    %128 = vector.shape_cast %127 : vector<4x8xf32> to vector<4x8x1xf32>
    %129 = tpu.reciprocal %128 : vector<4x8x1xf32> -> vector<4x8x1xf32>
    %130 = vector.broadcast %129 : vector<4x8x1xf32> to vector<4x8x8xf32>
    %131 = arith.mulf %126, %130 : vector<4x8x8xf32>
    %132 = arith.truncf %131 : vector<4x8x8xf32> to vector<4x8x8xbf16>
    "tpu.trace_start"() <{level = 10 : i32, message = "hqk,hkd->hqd"}> : () -> ()
    %cst_38 = arith.constant dense<0.000000e+00> : vector<4x8x8xf32>
    %133 = tpu.matmul %132, %120, %cst_38 {dimension_numbers = #tpu.dot_dimension_numbers<[2], [1], [1], [2], [0, 0, 0, 1, 1, 2], [0], [0]>} : vector<4x8x8xbf16>, vector<4x8x8xbf16>, vector<4x8x8xf32> -> vector<4x8x8xf32>
    "tpu.trace_stop"() : () -> ()
    %134 = tpu.transpose %133, [1, 0, 2] : vector<4x8x8xf32> -> vector<8x4x8xf32>
    %135 = vector.shape_cast %134 : vector<8x4x8xf32> to vector<8x32xf32>
    %136 = arith.truncf %135 : vector<8x32xf32> to vector<8x32xbf16>
    %cst_39 = arith.constant dense<0.000000e+00> : vector<8x32xf32>
    %137 = tpu.matmul %136, %3, %cst_39 {dimension_numbers = #tpu.dot_dimension_numbers<[1], [0], [0], [1], [0, 0, 1, 1], [], []>} : vector<8x32xbf16>, vector<32x32xbf16>, vector<8x32xf32> -> vector<8x32xf32>
    %138 = arith.addf %137, %15 : vector<8x32xf32>
    %139 = arith.addf %109, %138 : vector<8x32xf32>
    %cst_40 = arith.constant dense<0.000000e+00> : vector<8xf32>
    %140 = vector.multi_reduction <add>, %139, %cst_40 [1] : vector<8x32xf32> to vector<8xf32>
    %141 = vector.shape_cast %140 : vector<8xf32> to vector<8x1xf32>
    %cst_41 = arith.constant 3.200000e+01 : f32
    %142 = vector.broadcast %cst_41 : f32 to vector<8x1xf32>
    %143 = arith.divf %141, %142 : vector<8x1xf32>
    %144 = vector.broadcast %143 : vector<8x1xf32> to vector<8x32xf32>
    %145 = arith.subf %139, %144 : vector<8x32xf32>
    %146 = arith.mulf %145, %145 : vector<8x32xf32>
    %cst_42 = arith.constant dense<0.000000e+00> : vector<8xf32>
    %147 = vector.multi_reduction <add>, %146, %cst_42 [1] : vector<8x32xf32> to vector<8xf32>
    %148 = vector.shape_cast %147 : vector<8xf32> to vector<8x1xf32>
    %cst_43 = arith.constant 3.200000e+01 : f32
    %149 = vector.broadcast %cst_43 : f32 to vector<8x1xf32>
    %150 = arith.divf %148, %149 : vector<8x1xf32>
    %151 = vector.broadcast %143 : vector<8x1xf32> to vector<8x32xf32>
    %152 = arith.subf %139, %151 : vector<8x32xf32>
    %cst_44 = arith.constant 9.99999974E-6 : f32
    %153 = vector.broadcast %cst_44 : f32 to vector<8x1xf32>
    %154 = arith.addf %150, %153 : vector<8x1xf32>
    %155 = math.rsqrt %154 : vector<8x1xf32>
    %156 = vector.broadcast %155 : vector<8x1xf32> to vector<8x32xf32>
    %157 = arith.mulf %152, %156 : vector<8x32xf32>
    %158 = arith.mulf %157, %21 : vector<8x32xf32>
    %159 = arith.addf %158, %24 : vector<8x32xf32>
    %160 = arith.truncf %159 : vector<8x32xf32> to vector<8x32xbf16>
    %cst_45 = arith.constant dense<0.000000e+00> : vector<8x64xf32>
    %161 = tpu.matmul %160, %4, %cst_45 {dimension_numbers = #tpu.dot_dimension_numbers<[1], [0], [0], [1], [0, 0, 1, 1], [], []>} : vector<8x32xbf16>, vector<32x64xbf16>, vector<8x64xf32> -> vector<8x64xf32>
    %162 = arith.addf %161, %11 : vector<8x64xf32>
    %cst_46 = arith.constant 0.000000e+00 : f32
    %163 = vector.broadcast %cst_46 : f32 to vector<8x64xf32>
    %164 = arith.maximumf %162, %163 : vector<8x64xf32>
    %165 = arith.truncf %164 : vector<8x64xf32> to vector<8x64xbf16>
    %cst_47 = arith.constant dense<0.000000e+00> : vector<8x32xf32>
    %166 = tpu.matmul %165, %5, %cst_47 {dimension_numbers = #tpu.dot_dimension_numbers<[1], [0], [0], [1], [0, 0, 1, 1], [], []>} : vector<8x64xbf16>, vector<64x32xbf16>, vector<8x32xf32> -> vector<8x32xf32>
    %167 = arith.addf %166, %18 : vector<8x32xf32>
    %168 = arith.addf %159, %167 : vector<8x32xf32>
    %cst_48 = arith.constant dense<0.000000e+00> : vector<8xf32>
    %169 = vector.multi_reduction <add>, %168, %cst_48 [1] : vector<8x32xf32> to vector<8xf32>
    %170 = vector.shape_cast %169 : vector<8xf32> to vector<8x1xf32>
    %cst_49 = arith.constant 3.200000e+01 : f32
    %171 = vector.broadcast %cst_49 : f32 to vector<8x1xf32>
    %172 = arith.divf %170, %171 : vector<8x1xf32>
    %173 = vector.broadcast %172 : vector<8x1xf32> to vector<8x32xf32>
    %174 = arith.subf %168, %173 : vector<8x32xf32>
    %175 = arith.mulf %174, %174 : vector<8x32xf32>
    %cst_50 = arith.constant dense<0.000000e+00> : vector<8xf32>
    %176 = vector.multi_reduction <add>, %175, %cst_50 [1] : vector<8x32xf32> to vector<8xf32>
    %177 = vector.shape_cast %176 : vector<8xf32> to vector<8x1xf32>
    %cst_51 = arith.constant 3.200000e+01 : f32
    %178 = vector.broadcast %cst_51 : f32 to vector<8x1xf32>
    %179 = arith.divf %177, %178 : vector<8x1xf32>
    %180 = vector.broadcast %172 : vector<8x1xf32> to vector<8x32xf32>
    %181 = arith.subf %168, %180 : vector<8x32xf32>
    %cst_52 = arith.constant 9.99999974E-6 : f32
    %182 = vector.broadcast %cst_52 : f32 to vector<8x1xf32>
    %183 = arith.addf %179, %182 : vector<8x1xf32>
    %184 = math.rsqrt %183 : vector<8x1xf32>
    %185 = vector.broadcast %184 : vector<8x1xf32> to vector<8x32xf32>
    %186 = arith.mulf %181, %185 : vector<8x32xf32>
    %187 = arith.mulf %186, %27 : vector<8x32xf32>
    %188 = arith.addf %187, %30 : vector<8x32xf32>
    %c0_53 = arith.constant 0 : index
    %c0_54 = arith.constant 0 : index
    %c0_55 = arith.constant 0 : index
    %189 = vector.load %arg9[%c0_53, %c0_54, %c0_55] : memref<1x8x32xf32, #tpu.memory_space<vmem>>, vector<1x8x32xf32>
    %190 = vector.shape_cast %189 : vector<1x8x32xf32> to vector<8x32xf32>
    %191 = vector.shape_cast %188 : vector<8x32xf32> to vector<1x8x32xf32>
    tpu.vector_store %arg9[%c0_53, %c0_54, %c0_55], %191 {strides = array<i32>} : memref<1x8x32xf32, #tpu.memory_space<vmem>>, vector<1x8x32xf32>,
    return
  }
  func.func @transform_0(%arg0: i32) -> (i32, i32, i32) {
    %c0_i32 = arith.constant 0 : i32
    %c0_i32_0 = arith.constant 0 : i32
    %c0_i32_1 = arith.constant 0 : i32
    return %arg0, %c0_i32, %c0_i32_0 : i32, i32, i32
  }
  func.func @transform_1(%arg0: i32) -> (i32, i32) {
    %c0_i32 = arith.constant 0 : i32
    %c0_i32_0 = arith.constant 0 : i32
    %c0_i32_1 = arith.constant 0 : i32
    return %c0_i32, %c0_i32_0 : i32, i32
  }
  func.func @transform_2(%arg0: i32) -> (i32, i32) {
    %c0_i32 = arith.constant 0 : i32
    %c0_i32_0 = arith.constant 0 : i32
    %c0_i32_1 = arith.constant 0 : i32
    return %c0_i32, %c0_i32_0 : i32, i32
  }
  func.func @transform_3(%arg0: i32) -> (i32, i32) {
    %c0_i32 = arith.constant 0 : i32
    %c0_i32_0 = arith.constant 0 : i32
    %c0_i32_1 = arith.constant 0 : i32
    return %c0_i32, %c0_i32_0 : i32, i32
  }
  func.func @transform_4(%arg0: i32) -> (i32, i32) {
    %c0_i32 = arith.constant 0 : i32
    %c0_i32_0 = arith.constant 0 : i32
    %c0_i32_1 = arith.constant 0 : i32
    return %c0_i32, %c0_i32_0 : i32, i32
  }
  func.func @transform_5(%arg0: i32) -> (i32, i32) {
    %c0_i32 = arith.constant 0 : i32
    %c0_i32_0 = arith.constant 0 : i32
    %c0_i32_1 = arith.constant 0 : i32
    return %c0_i32, %c0_i32_0 : i32, i32
  }
  func.func @transform_6(%arg0: i32) -> (i32, i32) {
    %c0_i32 = arith.constant 0 : i32
    %c0_i32_0 = arith.constant 0 : i32
    %c0_i32_1 = arith.constant 0 : i32
    return %c0_i32, %c0_i32_0 : i32, i32
  }
  func.func @transform_7(%arg0: i32) -> (i32, i32) {
    %c0_i32 = arith.constant 0 : i32
    %c0_i32_0 = arith.constant 0 : i32
    %c0_i32_1 = arith.constant 0 : i32
    return %c0_i32, %c0_i32_0 : i32, i32
  }
  func.func @transform_8(%arg0: i32) -> (i32, i32, i32) {
    %c0_i32 = arith.constant 0 : i32
    %c0_i32_0 = arith.constant 0 : i32
    %c0_i32_1 = arith.constant 0 : i32
    return %arg0, %c0_i32, %c0_i32_0 : i32, i32, i32
  }
}

</mosaic_0001>

<llo_original>
// kernel: transformer_encoder_pallas.1
$region0: #{transformer_encoder_pallas.1}
  #allocation0 [shape = 'u32[]', space=smem, size = 0x4, offset = 0x4, fixed_abs, tag = 'smem constant byte address 0x4 - core index']
  #allocation1 [shape = 'u32[144,128]{1,0:T(1,128)}', space=vmem, size = 0x12000, scoped, tag = 'internal scratch']
  %s0 = inlined_call_operand.vmem [shape: f32[2,8,32], index: 0, kind: input, shape index: {}]
  %s1 = inlined_call_operand.vmem [shape: bf16[32,96], index: 1, kind: input, shape index: {}]
  %s2 = inlined_call_operand.vmem [shape: f32[1,96], index: 2, kind: input, shape index: {}]
  %s3 = inlined_call_operand.vmem [shape: bf16[32,32], index: 3, kind: input, shape index: {}]
  %s4 = inlined_call_operand.vmem [shape: bf16[32,64], index: 4, kind: input, shape index: {}]
  %s5 = inlined_call_operand.vmem [shape: f32[1,64], index: 5, kind: input, shape index: {}]
  %s6 = inlined_call_operand.vmem [shape: bf16[64,32], index: 6, kind: input, shape index: {}]
  %s7 = inlined_call_operand.vmem [shape: f32[6,32], index: 7, kind: input, shape index: {}]
  %s8 = inlined_call_operand.hbm [shape: f32[2,8,32], index: 8, kind: output, shape index: {}]
  %s9 = sld [smem:[#allocation0]]
  $region65: #{transformer_encoder_pallas.1} parent=0
    _
  %s11 = ssub.s32 1, %s9
  %s12 = scalar_select 0, %s11, %s9
  $region1: #{transformer_encoder_pallas.1} parent=0
    #allocation2 [shape = 'u8[8192]{0}', space=vmem, size = 0x2000, scoped, tag = 'output window, operand 0']
    #allocation3 [shape = 's32[2]{0}', space=sflag, size = 0x8, scoped, tag = 'scoped memory for transformer_encoder_pallas.1']
    %13 = vsyncpa [#allocation3], 0
    %s14 = scalar_lea.sflag [#allocation3], 1
    %15 = vsyncpa %s14, 0
    loop: start=0, step=1, limit=4
    $region2: #{transformer_encoder_pallas.1} parent=1 // loop_pre_header
      _
    $region3: #{transformer_encoder_pallas.1} parent=1 // loop_header
      %s17 = sphi 0, %s21
      %p18 = scmp.ge.s32.totalorder %s17, 4
      %s27 = sphi 0, %s29
      %s30 = sphi 0, %s27
      %s31 = sphi 0, %s30
      %s47 = sphi 0, %s31
      %s51 = sphi 0, %s51
      %s53 = sphi 0, %s51
      %s54 = sphi 0, %s53
      %s68 = sphi 0, %s54
      %s72 = sphi 0, %s72
      %s74 = sphi 0, %s72
      %s75 = sphi 0, %s74
      %s89 = sphi 0, %s75
      %s93 = sphi 0, %s93
      %s95 = sphi 0, %s93
      %s96 = sphi 0, %s95
      %s110 = sphi 0, %s96
      %s114 = sphi 0, %s114
      %s116 = sphi 0, %s114
      %s117 = sphi 0, %s116
      %s131 = sphi 0, %s117
      %s135 = sphi 0, %s135
      %s137 = sphi 0, %s135
      %s138 = sphi 0, %s137
      %s152 = sphi 0, %s138
      %s156 = sphi 0, %s156
      %s158 = sphi 0, %s156
      %s159 = sphi 0, %s158
      %s173 = sphi 0, %s159
      %s177 = sphi 0, %s177
      %s179 = sphi 0, %s177
      %s180 = sphi 0, %s179
      %s194 = sphi 0, %s180
      %s200 = sphi 0, %s202
      %s203 = sphi 0, %s200
      %s204 = sphi 0, %s203
      %s220 = sphi 0, %s204
    $region4: #{transformer_encoder_pallas.1} parent=1 // loop_header_branch
      %20 = sbr.rel (%p18) target = $region8
    $region5: #{transformer_encoder_pallas.1} parent=1 // loop_body
      %s22 = ssub.s32 %s17, 1
      %s23 = ssub.s32 %s17, 2
      %s24 = sadd.s32 %s17, 1
      %s25 = ssub.s32 %s17, %s24
      %p26 = scmp.eq.s32.totalorder %s25, 0
      %s28 = sadd.s32 %s27, 1
      %s29 = scalar_select %p26, %s27, %s28
      %p32 = pneg %p26
      %p33 = scmp.eq.s32.totalorder %s17, 1
      %p34 = por %p32, %p33
      %p35 = scmp.ne.s32.totalorder %s27, %s30
      %p36 = scmp.eq.s32.totalorder %s17, 0
      %p37 = por %p35, %p36
      %p38 = scmp.ne.s32.totalorder %s27, %s30
      %p39 = scmp.eq.s32.totalorder %s22, 1
      %p40 = por %p38, %p39
      %p41 = scmp.ne.s32.totalorder %s30, %s31
      %p42 = scmp.eq.s32.totalorder %s22, 0
      %p43 = por %p41, %p42
      %p44 = scmp.ne.s32.totalorder %s30, %s31
      %p45 = scmp.eq.s32.totalorder %s23, 1
      %p46 = por %p44, %p45
      %p48 = scmp.ne.s32.totalorder %s31, %s47
      %p49 = scmp.eq.s32.totalorder %s23, 0
      %p50 = por %p48, %p49
      %s52 = sadd.s32 %s51, 1
      %p55 = scmp.eq.s32.totalorder %s17, 1
      %p56 = scmp.ne.s32.totalorder %s51, %s53
      %p57 = scmp.eq.s32.totalorder %s17, 0
      %p58 = por %p56, %p57
      %p59 = scmp.ne.s32.totalorder %s51, %s53
      %p60 = scmp.eq.s32.totalorder %s22, 1
      %p61 = por %p59, %p60
      %p62 = scmp.ne.s32.totalorder %s53, %s54
      %p63 = scmp.eq.s32.totalorder %s22, 0
      %p64 = por %p62, %p63
      %p65 = scmp.ne.s32.totalorder %s53, %s54
      %p66 = scmp.eq.s32.totalorder %s23, 1
      %p67 = por %p65, %p66
      %p69 = scmp.ne.s32.totalorder %s54, %s68
      %p70 = scmp.eq.s32.totalorder %s23, 0
      %p71 = por %p69, %p70
      %s73 = sadd.s32 %s72, 1
      %p76 = scmp.eq.s32.totalorder %s17, 1
      %p77 = scmp.ne.s32.totalorder %s72, %s74
      %p78 = scmp.eq.s32.totalorder %s17, 0
      %p79 = por %p77, %p78
      %p80 = scmp.ne.s32.totalorder %s72, %s74
      %p81 = scmp.eq.s32.totalorder %s22, 1
      %p82 = por %p80, %p81
      %p83 = scmp.ne.s32.totalorder %s74, %s75
      %p84 = scmp.eq.s32.totalorder %s22, 0
      %p85 = por %p83, %p84
      %p86 = scmp.ne.s32.totalorder %s74, %s75
      %p87 = scmp.eq.s32.totalorder %s23, 1
      %p88 = por %p86, %p87
      %p90 = scmp.ne.s32.totalorder %s75, %s89
      %p91 = scmp.eq.s32.totalorder %s23, 0
      %p92 = por %p90, %p91
      %s94 = sadd.s32 %s93, 1
      %p97 = scmp.eq.s32.totalorder %s17, 1
      %p98 = scmp.ne.s32.totalorder %s93, %s95
      %p99 = scmp.eq.s32.totalorder %s17, 0
      %p100 = por %p98, %p99
      %p101 = scmp.ne.s32.totalorder %s93, %s95
      %p102 = scmp.eq.s32.totalorder %s22, 1
      %p103 = por %p101, %p102
      %p104 = scmp.ne.s32.totalorder %s95, %s96
      %p105 = scmp.eq.s32.totalorder %s22, 0
      %p106 = por %p104, %p105
      %p107 = scmp.ne.s32.totalorder %s95, %s96
      %p108 = scmp.eq.s32.totalorder %s23, 1
      %p109 = por %p107, %p108
      %p111 = scmp.ne.s32.totalorder %s96, %s110
      %p112 = scmp.eq.s32.totalorder %s23, 0
      %p113 = por %p111, %p112
      %s115 = sadd.s32 %s114, 1
      %p118 = scmp.eq.s32.totalorder %s17, 1
      %p119 = scmp.ne.s32.totalorder %s114, %s116
      %p120 = scmp.eq.s32.totalorder %s17, 0
      %p121 = por %p119, %p120
      %p122 = scmp.ne.s32.totalorder %s114, %s116
      %p123 = scmp.eq.s32.totalorder %s22, 1
      %p124 = por %p122, %p123
      %p125 = scmp.ne.s32.totalorder %s116, %s117
      %p126 = scmp.eq.s32.totalorder %s22, 0
      %p127 = por %p125, %p126
      %p128 = scmp.ne.s32.totalorder %s116, %s117
      %p129 = scmp.eq.s32.totalorder %s23, 1
      %p130 = por %p128, %p129
      %p132 = scmp.ne.s32.totalorder %s117, %s131
      %p133 = scmp.eq.s32.totalorder %s23, 0
      %p134 = por %p132, %p133
      %s136 = sadd.s32 %s135, 1
      %p139 = scmp.eq.s32.totalorder %s17, 1
      %p140 = scmp.ne.s32.totalorder %s135, %s137
      %p141 = scmp.eq.s32.totalorder %s17, 0
      %p142 = por %p140, %p141
      %p143 = scmp.ne.s32.totalorder %s135, %s137
      %p144 = scmp.eq.s32.totalorder %s22, 1
      %p145 = por %p143, %p144
      %p146 = scmp.ne.s32.totalorder %s137, %s138
      %p147 = scmp.eq.s32.totalorder %s22, 0
      %p148 = por %p146, %p147
      %p149 = scmp.ne.s32.totalorder %s137, %s138
      %p150 = scmp.eq.s32.totalorder %s23, 1
      %p151 = por %p149, %p150
      %p153 = scmp.ne.s32.totalorder %s138, %s152
      %p154 = scmp.eq.s32.totalorder %s23, 0
      %p155 = por %p153, %p154
      %s157 = sadd.s32 %s156, 1
      %p160 = scmp.eq.s32.totalorder %s17, 1
      %p161 = scmp.ne.s32.totalorder %s156, %s158
      %p162 = scmp.eq.s32.totalorder %s17, 0
      %p163 = por %p161, %p162
      %p164 = scmp.ne.s32.totalorder %s156, %s158
      %p165 = scmp.eq.s32.totalorder %s22, 1
      %p166 = por %p164, %p165
      %p167 = scmp.ne.s32.totalorder %s158, %s159
      %p168 = scmp.eq.s32.totalorder %s22, 0
      %p169 = por %p167, %p168
      %p170 = scmp.ne.s32.totalorder %s158, %s159
      %p171 = scmp.eq.s32.totalorder %s23, 1
      %p172 = por %p170, %p171
      %p174 = scmp.ne.s32.totalorder %s159, %s173
      %p175 = scmp.eq.s32.totalorder %s23, 0
      %p176 = por %p174, %p175
      %s178 = sadd.s32 %s177, 1
      %p181 = scmp.eq.s32.totalorder %s17, 1
      %p182 = scmp.ne.s32.totalorder %s177, %s179
      %p183 = scmp.eq.s32.totalorder %s17, 0
      %p184 = por %p182, %p183
      %p185 = scmp.ne.s32.totalorder %s177, %s179
      %p186 = scmp.eq.s32.totalorder %s22, 1
      %p187 = por %p185, %p186
      %p188 = scmp.ne.s32.totalorder %s179, %s180
      %p189 = scmp.eq.s32.totalorder %s22, 0
      %p190 = por %p188, %p189
      %p191 = scmp.ne.s32.totalorder %s179, %s180
      %p192 = scmp.eq.s32.totalorder %s23, 1
      %p193 = por %p191, %p192
      %p195 = scmp.ne.s32.totalorder %s180, %s194
      %p196 = scmp.eq.s32.totalorder %s23, 0
      %p197 = por %p195, %p196
      %s198 = ssub.s32 %s17, %s24
      %p199 = scmp.eq.s32.totalorder %s198, 0
      %s201 = sadd.s32 %s200, 1
      %s202 = scalar_select %p199, %s200, %s201
      %p205 = pneg %p199
      %p206 = scmp.eq.s32.totalorder %s17, 1
      %p207 = por %p205, %p206
      %p208 = scmp.ne.s32.totalorder %s200, %s203
      %p209 = scmp.eq.s32.totalorder %s17, 0
      %p210 = por %p208, %p209
      %p211 = scmp.ne.s32.totalorder %s200, %s203
      %p212 = scmp.eq.s32.totalorder %s22, 1
      %p213 = por %p211, %p212
      %p214 = scmp.ne.s32.totalorder %s203, %s204
      %p215 = scmp.eq.s32.totalorder %s22, 0
      %p216 = por %p214, %p215
      %p217 = scmp.ne.s32.totalorder %s203, %s204
      %p218 = scmp.eq.s32.totalorder %s23, 1
      %p219 = por %p217, %p218
      %p221 = scmp.ne.s32.totalorder %s204, %s220
      %p222 = scmp.eq.s32.totalorder %s23, 0
      %p223 = por %p221, %p222
      %p224 = scmp.le.s32.totalorder 1, %s17
      %p225 = scmp.lt.s32.totalorder %s17, 3
      %p226 = pnand %p224, %p225
      %p227 = pneg %p226
      // Predicated region
      $region9: #{transformer_encoder_pallas.1} parent=5 // pred_check
        _
      $region10: #{transformer_encoder_pallas.1} parent=5 // pred_check_branch
        %229 = sbr.rel (%p226) target = $region12
      $region11: #{transformer_encoder_pallas.1} parent=5 // pred_region
        %s230 = ssub.s32 %s17, 1
        // Predicated region
        $region13: #{transformer_encoder_pallas.1} parent=11 // pred_check
          %p231 = pneg %p64
        $region14: #{transformer_encoder_pallas.1} parent=11 // pred_check_branch
          %233 = sbr.rel (%p231) target = $region16
        $region15: #{transformer_encoder_pallas.1} parent=11 // pred_region
          _
        $region16: #{transformer_encoder_pallas.1} parent=11 // pred_fallthru
          _
        // Predicated region
        $region17: #{transformer_encoder_pallas.1} parent=11 // pred_check
          %p234 = pneg %p85
        $region18: #{transformer_encoder_pallas.1} parent=11 // pred_check_branch
          %236 = sbr.rel (%p234) target = $region20
        $region19: #{transformer_encoder_pallas.1} parent=11 // pred_region
          _
        $region20: #{transformer_encoder_pallas.1} parent=11 // pred_fallthru
          _
        // Predicated region
        $region21: #{transformer_encoder_pallas.1} parent=11 // pred_check
          %p237 = pneg %p106
        $region22: #{transformer_encoder_pallas.1} parent=11 // pred_check_branch
          %239 = sbr.rel (%p237) target = $region24
        $region23: #{transformer_encoder_pallas.1} parent=11 // pred_region
          _
        $region24: #{transformer_encoder_pallas.1} parent=11 // pred_fallthru
          _
        // Predicated region
        $region25: #{transformer_encoder_pallas.1} parent=11 // pred_check
          %p240 = pneg %p127
        $region26: #{transformer_encoder_pallas.1} parent=11 // pred_check_branch
          %242 = sbr.rel (%p240) target = $region28
        $region27: #{transformer_encoder_pallas.1} parent=11 // pred_region
          _
        $region28: #{transformer_encoder_pallas.1} parent=11 // pred_fallthru
          _
        // Predicated region
        $region29: #{transformer_encoder_pallas.1} parent=11 // pred_check
          %p243 = pneg %p148
        $region30: #{transformer_encoder_pallas.1} parent=11 // pred_check_branch
          %245 = sbr.rel (%p243) target = $region32
        $region31: #{transformer_encoder_pallas.1} parent=11 // pred_region
          _
        $region32: #{transformer_encoder_pallas.1} parent=11 // pred_fallthru
          _
        // Predicated region
        $region33: #{transformer_encoder_pallas.1} parent=11 // pred_check
          %p246 = pneg %p169
        $region34: #{transformer_encoder_pallas.1} parent=11 // pred_check_branch
          %248 = sbr.rel (%p246) target = $region36
        $region35: #{transformer_encoder_pallas.1} parent=11 // pred_region
          _
        $region36: #{transformer_encoder_pallas.1} parent=11 // pred_fallthru
          _
        // Predicated region
        $region37: #{transformer_encoder_pallas.1} parent=11 // pred_check
          %p249 = pneg %p190
        $region38: #{transformer_encoder_pallas.1} parent=11 // pred_check_branch
          %251 = sbr.rel (%p249) target = $region40
        $region39: #{transformer_encoder_pallas.1} parent=11 // pred_region
          _
        $region40: #{transformer_encoder_pallas.1} parent=11 // pred_fallthru
          _
      $region12: #{transformer_encoder_pallas.1} parent=5 // pred_fallthru
        _
      %p252 = scmp.lt.s32.totalorder %s17, 2
      // Predicated region
      $region41: #{transformer_encoder_pallas.1} parent=5 // pred_check
        %p253 = pneg %p252
      $region42: #{transformer_encoder_pallas.1} parent=5 // pred_check_branch
        %255 = sbr.rel (%p253) target = $region44
      $region43: #{transformer_encoder_pallas.1} parent=5 // pred_region
        // Predicated region
        $region45: #{transformer_encoder_pallas.1} parent=43 // pred_check
          %p256 = pneg %p37
        $region46: #{transformer_encoder_pallas.1} parent=43 // pred_check_branch
          %258 = sbr.rel (%p256) target = $region48
        $region47: #{transformer_encoder_pallas.1} parent=43 // pred_region
          %p259 = scmp.lt.s32.totalorder %s17, 1
          %s260 = scalar_select %p259, %s17, 1
          %s261 = smul.addr %s260, 8
          %s262 = scalar_lea.vmem %s0, %s261
        $region48: #{transformer_encoder_pallas.1} parent=43 // pred_fallthru
          _
      $region44: #{transformer_encoder_pallas.1} parent=5 // pred_fallthru
        _
      %p263 = scmp.le.s32.totalorder 1, %s17
      %p264 = scmp.lt.s32.totalorder %s17, 3
      %p265 = pnand %p263, %p264
      %p266 = pneg %p265
      // Predicated region
      $region49: #{transformer_encoder_pallas.1} parent=5 // pred_check
        _
      $region50: #{transformer_encoder_pallas.1} parent=5 // pred_check_branch
        %268 = sbr.rel (%p265) target = $region52
      $region51: #{transformer_encoder_pallas.1} parent=5 // pred_region
        %s269 = ssub.s32 %s17, 1
        %p270 = scmp.lt.s32.totalorder %s22, 1
        %s271 = scalar_select %p270, %s22, 1
        %s272 = smul.addr %s271, 8
        %s273 = scalar_lea.vmem %s0, %s272
        %p274 = pneg %p43
        %p275 = pneg %p40
        %p276 = pneg %p64
        %p277 = pneg %p61
        %p278 = pneg %p85
        %p279 = pneg %p82
        %p280 = pneg %p106
        %p281 = pneg %p103
        %p282 = pneg %p127
        %p283 = pneg %p124
        %p284 = pneg %p148
        %p285 = pneg %p145
        %p286 = pneg %p169
        %p287 = pneg %p166
        %p288 = pneg %p190
        %p289 = pneg %p187
        %p290 = pneg %p216
        %p291 = pneg %p213
        %s292 = sand.u32 %s203, 1
        %s293 = scalar_lea.sflag [#allocation3], %s292
        %s294 = sand.u32 %s203, 1
        %s295 = smul.addr %s294, 8
        %s296 = scalar_lea.vmem [#allocation2], %s295
        %p297 = scmp.lt.s32.totalorder %s22, 1
        %s298 = scalar_select %p297, %s22, 1
        %s299 = smul.addr %s298, 8
        %s300 = scalar_lea.vmem %s0, %s299
        %v302 = vld [vmem:[%s300] sm:$0xff]
        %v303 = vld [vmem:[%s1] sm:$0xf]
        %v304 = vld [vmem:[%s1 + $0x4] sm:$0xf]
        %v305 = vld [vmem:[%s1 + $0x8] sm:$0xf]
        %v306 = vld [vmem:[%s1 + $0xc] sm:$0xf]
        %v307 = vld [vmem:[%s3] sm:$0xf]
        %v308 = vld [vmem:[%s3 + $0x4] sm:$0xf]
        %v309 = vld [vmem:[%s3 + $0x8] sm:$0xf]
        %v310 = vld [vmem:[%s3 + $0xc] sm:$0xf]
        %v311 = vld [vmem:[%s4] sm:$0xf]
        %v312 = vld [vmem:[%s4 + $0x4] sm:$0xf]
        %v313 = vld [vmem:[%s4 + $0x8] sm:$0xf]
        %v314 = vld [vmem:[%s4 + $0xc] sm:$0xf]
        %v315 = vld [vmem:[%s6] sm:$0xf]
        %v316 = vld [vmem:[%s6 + $0x4] sm:$0xf]
        %v317 = vld [vmem:[%s6 + $0x8] sm:$0xf]
        %v318 = vld [vmem:[%s6 + $0xc] sm:$0xf]
        %v319 = vld [vmem:[%s6 + $0x10] sm:$0xf]
        %v320 = vld [vmem:[%s6 + $0x14] sm:$0xf]
        %v321 = vld [vmem:[%s6 + $0x18] sm:$0xf]
        %v322 = vld [vmem:[%s6 + $0x1c] sm:$0xf]
        %v323 = vld [vmem:[%s2] sm:$0x1]
        %v325 = vlaneseq
        %v326 = vshrl.u32 %v325, 7
        %v327 = vsub.s32 0, %v326
        %v328 = vrot.slane %v323, %v327
        %v330 = vld [vmem:[%s5] sm:$0x1]
        %v332 = vlaneseq
        %v333 = vshrl.u32 %v332, 7
        %v334 = vsub.s32 0, %v333
        %v335 = vrot.slane %v330, %v334
        %v337 = vld [vmem:[%s7] sm:$0x3f]
        %v338 = vlaneseq
        %v339 = vshrl.u32 %v338, 7
        %v340 = vsub.s32 0, %v339
        %v341 = vrot.slane %v337, %v340
        %v342 = vlaneseq
        %v343 = vshrl.u32 %v342, 7
        %v344 = vsub.s32 1, %v343
        %v345 = vrot.slane %v337, %v344
        %v346 = vlaneseq
        %v347 = vshrl.u32 %v346, 7
        %v348 = vsub.s32 2, %v347
        %v349 = vrot.slane %v337, %v348
        %v350 = vlaneseq
        %v351 = vshrl.u32 %v350, 7
        %v352 = vsub.s32 3, %v351
        %v353 = vrot.slane %v337, %v352
        %v354 = vlaneseq
        %v355 = vshrl.u32 %v354, 7
        %v356 = vsub.s32 4, %v355
        %v357 = vrot.slane %v337, %v356
        %v358 = vlaneseq
        %v359 = vshrl.u32 %v358, 7
        %v360 = vsub.s32 5, %v359
        %v361 = vrot.slane %v337, %v360
        %v362 = vpack.c.bf16 %v302, %v302
        %v367 = vunpack.c.l.b16 %v303
        %v368 = vunpack.c.l.b16 %v304
        %v369 = vunpack.c.l.b16 %v305
        %v370 = vunpack.c.l.b16 %v306
        %v371 = vpack.c.b16 %v368, %v367
        %v372 = vpack.c.b16 %v370, %v369
        %vm375 = vcmask 261120
        %v377 = vsel %vm375, %v362, 0
        %379 = vmatprep.subr.bf16.mxu0 0
        %380 = vmatpush1.bf16.msra.mxu0 %v371
        %381 = vmatprep.subr.bf16.mxu0 0
        %382 = vmatpush1.bf16.msra.mxu0 %v372
        %383 = vmatprep.subr.bf16.mxu0 0
        %384 = vmatpush1.bf16.msra.mxu0 0
        %385 = vmatprep.subr.bf16.mxu0 0
        %386 = vmatpush1.bf16.msra.mxu0 0
        %387 = vmatprep.subr.bf16.mxu0 0
        %388 = vmatpush1.bf16.msra.mxu0 0
        %389 = vmatprep.subr.bf16.mxu0 0
        %390 = vmatpush1.bf16.msra.mxu0 0
        %391 = vmatprep.subr.bf16.mxu0 0
        %392 = vmatpush1.bf16.msra.mxu0 0
        %393 = vmatprep.subr.bf16.mxu0 0
        %394 = vmatpush1.bf16.msra.mxu0 0
        %395 = vmatprep.subr.bf16.mxu0 0
        %396 = vmatpush1.bf16.msra.mxu0 0
        %397 = vmatprep.subr.bf16.mxu0 0
        %398 = vmatpush1.bf16.msra.mxu0 0
        %399 = vmatprep.subr.bf16.mxu0 0
        %400 = vmatpush1.bf16.msra.mxu0 0
        %401 = vmatprep.subr.bf16.mxu0 0
        %402 = vmatpush1.bf16.msra.mxu0 0
        %403 = vmatprep.subr.bf16.mxu0 0
        %404 = vmatpush1.bf16.msra.mxu0 0
        %405 = vmatprep.subr.bf16.mxu0 0
        %406 = vmatpush1.bf16.msra.mxu0 0
        %407 = vmatprep.subr.bf16.mxu0 0
        %408 = vmatpush1.bf16.msra.mxu0 0
        %409 = vmatprep.subr.bf16.mxu0 0
        %410 = vmatpush1.bf16.msra.mxu0 0
        %411 = vmatprep.mubr.bf16.mxu0 0
        %412 = vmatmul.mubr.bf16.gmra.mrb[0].mxu0 %v377
        %v413 = vpop.f32.mrb[0].mxu0
        %v414 = vadd.f32 %v328, %v413
        %v415 = vpop.f32.mrb[0].mxu0
        %v416 = vpop.f32.mrb[0].mxu0
        %v417 = vpop.f32.mrb[0].mxu0
        %418 = vdwg.mxu0
        %420 = vrot.lane.b32.xlu0 %v414, 120
        %v421 = vpop.permute.xlu0 %420
        %423 = vrot.lane.b32.xlu0 %v414, 112
        %v424 = vpop.permute.xlu0 %423
        %426 = vrot.lane.b32.xlu0 %v414, 104
        %v427 = vpop.permute.xlu0 %426
        %429 = vrot.lane.b32.xlu0 %v414, 96
        %v430 = vpop.permute.xlu0 %429
        %432 = vrot.lane.b32.xlu0 %v414, 88
        %v433 = vpop.permute.xlu0 %432
        %435 = vrot.lane.b32.xlu0 %v414, 80
        %v436 = vpop.permute.xlu0 %435
        %438 = vrot.lane.b32.xlu0 %v414, 72
        %v439 = vpop.permute.xlu0 %438
        %441 = vrot.lane.b32.xlu0 %v414, 64
        %v442 = vpop.permute.xlu0 %441
        %444 = vrot.lane.b32.xlu0 %v414, 56
        %v445 = vpop.permute.xlu0 %444
        %447 = vrot.lane.b32.xlu0 %v414, 48
        %v448 = vpop.permute.xlu0 %447
        %450 = vrot.lane.b32.xlu0 %v414, 40
        %v451 = vpop.permute.xlu0 %450
        %v453 = vcombine.low %v414, %v424
        %v454 = vcombine.high %v414, %v424
        %v456 = vunpack.c.l.s4 1983009808
        %v457 = vunpack.c.0.s8 %v456
        %v458 = vlaneseq
        %v459 = vshrl.u32 %v458, 7
        %v460 = vsub.s32 %v457, %v459
        %v461 = vrot.slane %v453, %v460
        %v463 = vunpack.c.l.s4 1983009808
        %v464 = vunpack.c.0.s8 %v463
        %v465 = vlaneseq
        %v466 = vshrl.u32 %v465, 7
        %v467 = vsub.s32 %v464, %v466
        %v468 = vrot.slane %v454, %v467
        %v469 = vcombine.low %v421, %v427
        %v470 = vcombine.high %v421, %v427
        %v472 = vunpack.c.l.s4 1983009808
        %v473 = vunpack.c.0.s8 %v472
        %v474 = vlaneseq
        %v475 = vshrl.u32 %v474, 7
        %v476 = vsub.s32 %v473, %v475
        %v477 = vrot.slane %v469, %v476
        %v479 = vunpack.c.l.s4 1983009808
        %v480 = vunpack.c.0.s8 %v479
        %v481 = vlaneseq
        %v482 = vshrl.u32 %v481, 7
        %v483 = vsub.s32 %v480, %v482
        %v484 = vrot.slane %v470, %v483
        %v485 = vcombine.low %v430, %v436
        %v486 = vcombine.high %v430, %v436
        %v488 = vunpack.c.l.s4 1983009808
        %v489 = vunpack.c.0.s8 %v488
        %v490 = vlaneseq
        %v491 = vshrl.u32 %v490, 7
        %v492 = vsub.s32 %v489, %v491
        %v493 = vrot.slane %v485, %v492
        %v495 = vunpack.c.l.s4 1983009808
        %v496 = vunpack.c.0.s8 %v495
        %v497 = vlaneseq
        %v498 = vshrl.u32 %v497, 7
        %v499 = vsub.s32 %v496, %v498
        %v500 = vrot.slane %v486, %v499
        %v501 = vcombine.low %v433, %v439
        %v502 = vcombine.high %v433, %v439
        %v504 = vunpack.c.l.s4 1983009808
        %v505 = vunpack.c.0.s8 %v504
        %v506 = vlaneseq
        %v507 = vshrl.u32 %v506, 7
        %v508 = vsub.s32 %v505, %v507
        %v509 = vrot.slane %v501, %v508
        %v511 = vunpack.c.l.s4 1983009808
        %v512 = vunpack.c.0.s8 %v511
        %v513 = vlaneseq
        %v514 = vshrl.u32 %v513, 7
        %v515 = vsub.s32 %v512, %v514
        %v516 = vrot.slane %v502, %v515
        %v517 = vcombine.low %v461, %v477
        %v518 = vcombine.high %v461, %v477
        %v520 = vunpack.c.l.s4 1934713408
        %v521 = vunpack.c.0.s8 %v520
        %v522 = vlaneseq
        %v523 = vshrl.u32 %v522, 7
        %v524 = vsub.s32 %v521, %v523
        %v525 = vrot.slane %v517, %v524
        %v527 = vunpack.c.l.s4 1934713408
        %v528 = vunpack.c.0.s8 %v527
        %v529 = vlaneseq
        %v530 = vshrl.u32 %v529, 7
        %v531 = vsub.s32 %v528, %v530
        %v532 = vrot.slane %v518, %v531
        %v533 = vcombine.low %v468, %v484
        %v534 = vcombine.high %v468, %v484
        %v536 = vunpack.c.l.s4 1934713408
        %v537 = vunpack.c.0.s8 %v536
        %v538 = vlaneseq
        %v539 = vshrl.u32 %v538, 7
        %v540 = vsub.s32 %v537, %v539
        %v541 = vrot.slane %v533, %v540
        %v543 = vunpack.c.l.s4 1934713408
        %v544 = vunpack.c.0.s8 %v543
        %v545 = vlaneseq
        %v546 = vshrl.u32 %v545, 7
        %v547 = vsub.s32 %v544, %v546
        %v548 = vrot.slane %v534, %v547
        %v549 = vcombine.low %v493, %v509
        %v550 = vcombine.high %v493, %v509
        %v552 = vunpack.c.l.s4 1934713408
        %v553 = vunpack.c.0.s8 %v552
        %v554 = vlaneseq
        %v555 = vshrl.u32 %v554, 7
        %v556 = vsub.s32 %v553, %v555
        %v557 = vrot.slane %v549, %v556
        %v559 = vunpack.c.l.s4 1934713408
        %v560 = vunpack.c.0.s8 %v559
        %v561 = vlaneseq
        %v562 = vshrl.u32 %v561, 7
        %v563 = vsub.s32 %v560, %v562
        %v564 = vrot.slane %v550, %v563
        %v565 = vcombine.low %v500, %v516
        %v566 = vcombine.high %v500, %v516
        %v568 = vunpack.c.l.s4 1934713408
        %v569 = vunpack.c.0.s8 %v568
        %v570 = vlaneseq
        %v571 = vshrl.u32 %v570, 7
        %v572 = vsub.s32 %v569, %v571
        %v573 = vrot.slane %v565, %v572
        %v575 = vunpack.c.l.s4 1934713408
        %v576 = vunpack.c.0.s8 %v575
        %v577 = vlaneseq
        %v578 = vshrl.u32 %v577, 7
        %v579 = vsub.s32 %v576, %v578
        %v580 = vrot.slane %v566, %v579
        %v581 = vcombine.low %v525, %v557
        %v582 = vcombine.high %v525, %v557
        %v583 = vcombine.low %v532, %v564
        %v584 = vcombine.high %v532, %v564
        %v585 = vcombine.low %v541, %v573
        %v586 = vcombine.high %v541, %v573
        %v587 = vcombine.low %v548, %v580
        %v588 = vcombine.high %v548, %v580
        %v589 = vcombine.low %v442, %v448
        %v590 = vcombine.high %v442, %v448
        %v592 = vunpack.c.l.s4 1983009808
        %v593 = vunpack.c.0.s8 %v592
        %v594 = vlaneseq
        %v595 = vshrl.u32 %v594, 7
        %v596 = vsub.s32 %v593, %v595
        %v597 = vrot.slane %v589, %v596
        %v599 = vunpack.c.l.s4 1983009808
        %v600 = vunpack.c.0.s8 %v599
        %v601 = vlaneseq
        %v602 = vshrl.u32 %v601, 7
        %v603 = vsub.s32 %v600, %v602
        %v604 = vrot.slane %v590, %v603
        %v605 = vcombine.low %v445, %v451
        %v606 = vcombine.high %v445, %v451
        %v608 = vunpack.c.l.s4 1983009808
        %v609 = vunpack.c.0.s8 %v608
        %v610 = vlaneseq
        %v611 = vshrl.u32 %v610, 7
        %v612 = vsub.s32 %v609, %v611
        %v613 = vrot.slane %v605, %v612
        %v615 = vunpack.c.l.s4 1983009808
        %v616 = vunpack.c.0.s8 %v615
        %v617 = vlaneseq
        %v618 = vshrl.u32 %v617, 7
        %v619 = vsub.s32 %v616, %v618
        %v620 = vrot.slane %v606, %v619
        %v621 = vcombine.low %v597, %v613
        %v622 = vcombine.high %v597, %v613
        %v624 = vunpack.c.l.s4 1934713408
        %v625 = vunpack.c.0.s8 %v624
        %v626 = vlaneseq
        %v627 = vshrl.u32 %v626, 7
        %v628 = vsub.s32 %v625, %v627
        %v629 = vrot.slane %v621, %v628
        %v631 = vunpack.c.l.s4 1934713408
        %v632 = vunpack.c.0.s8 %v631
        %v633 = vlaneseq
        %v634 = vshrl.u32 %v633, 7
        %v635 = vsub.s32 %v632, %v634
        %v636 = vrot.slane %v622, %v635
        %v637 = vcombine.low %v604, %v620
        %v638 = vcombine.high %v604, %v620
        %v640 = vunpack.c.l.s4 1934713408
        %v641 = vunpack.c.0.s8 %v640
        %v642 = vlaneseq
        %v643 = vshrl.u32 %v642, 7
        %v644 = vsub.s32 %v641, %v643
        %v645 = vrot.slane %v637, %v644
        %v647 = vunpack.c.l.s4 1934713408
        %v648 = vunpack.c.0.s8 %v647
        %v649 = vlaneseq
        %v650 = vshrl.u32 %v649, 7
        %v651 = vsub.s32 %v648, %v650
        %v652 = vrot.slane %v638, %v651
        %v653 = vcombine.high %v629, 0.0
        %v654 = vcombine.high %v636, 0.0
        %v655 = vcombine.high %v645, 0.0
        %v656 = vcombine.high %v652, 0.0
        %v657 = vcombine.low %v581, %v583
        %v658 = vcombine.high %v581, %v583
        %v660 = vunpack.c.l.s4 1983009808
        %v661 = vunpack.c.0.s8 %v660
        %v662 = vlaneseq
        %v663 = vshrl.u32 %v662, 7
        %v664 = vsub.s32 %v661, %v663
        %v665 = vrot.slane %v657, %v664
        %v667 = vunpack.c.l.s4 1983009808
        %v668 = vunpack.c.0.s8 %v667
        %v669 = vlaneseq
        %v670 = vshrl.u32 %v669, 7
        %v671 = vsub.s32 %v668, %v670
        %v672 = vrot.slane %v658, %v671
        %v673 = vcombine.low %v582, %v584
        %v674 = vcombine.high %v582, %v584
        %v676 = vunpack.c.l.s4 1983009808
        %v677 = vunpack.c.0.s8 %v676
        %v678 = vlaneseq
        %v679 = vshrl.u32 %v678, 7
        %v680 = vsub.s32 %v677, %v679
        %v681 = vrot.slane %v673, %v680
        %v683 = vunpack.c.l.s4 1983009808
        %v684 = vunpack.c.0.s8 %v683
        %v685 = vlaneseq
        %v686 = vshrl.u32 %v685, 7
        %v687 = vsub.s32 %v684, %v686
        %v688 = vrot.slane %v674, %v687
        %v689 = vcombine.low %v585, %v587
        %v690 = vcombine.high %v585, %v587
        %v692 = vunpack.c.l.s4 1983009808
        %v693 = vunpack.c.0.s8 %v692
        %v694 = vlaneseq
        %v695 = vshrl.u32 %v694, 7
        %v696 = vsub.s32 %v693, %v695
        %v697 = vrot.slane %v689, %v696
        %v699 = vunpack.c.l.s4 1983009808
        %v700 = vunpack.c.0.s8 %v699
        %v701 = vlaneseq
        %v702 = vshrl.u32 %v701, 7
        %v703 = vsub.s32 %v700, %v702
        %v704 = vrot.slane %v690, %v703
        %v705 = vcombine.low %v586, %v588
        %v706 = vcombine.high %v586, %v588
        %v708 = vunpack.c.l.s4 1983009808
        %v709 = vunpack.c.0.s8 %v708
        %v710 = vlaneseq
        %v711 = vshrl.u32 %v710, 7
        %v712 = vsub.s32 %v709, %v711
        %v713 = vrot.slane %v705, %v712
        %v715 = vunpack.c.l.s4 1983009808
        %v716 = vunpack.c.0.s8 %v715
        %v717 = vlaneseq
        %v718 = vshrl.u32 %v717, 7
        %v719 = vsub.s32 %v716, %v718
        %v720 = vrot.slane %v706, %v719
        %v721 = vcombine.low %v665, %v681
        %v722 = vcombine.high %v665, %v681
        %v724 = vunpack.c.l.s4 1934713408
        %v725 = vunpack.c.0.s8 %v724
        %v726 = vlaneseq
        %v727 = vshrl.u32 %v726, 7
        %v728 = vsub.s32 %v725, %v727
        %v729 = vrot.slane %v721, %v728
        %v731 = vunpack.c.l.s4 1934713408
        %v732 = vunpack.c.0.s8 %v731
        %v733 = vlaneseq
        %v734 = vshrl.u32 %v733, 7
        %v735 = vsub.s32 %v732, %v734
        %v736 = vrot.slane %v722, %v735
        %v737 = vcombine.low %v672, %v688
        %v738 = vcombine.high %v672, %v688
        %v740 = vunpack.c.l.s4 1934713408
        %v741 = vunpack.c.0.s8 %v740
        %v742 = vlaneseq
        %v743 = vshrl.u32 %v742, 7
        %v744 = vsub.s32 %v741, %v743
        %v745 = vrot.slane %v737, %v744
        %v747 = vunpack.c.l.s4 1934713408
        %v748 = vunpack.c.0.s8 %v747
        %v749 = vlaneseq
        %v750 = vshrl.u32 %v749, 7
        %v751 = vsub.s32 %v748, %v750
        %v752 = vrot.slane %v738, %v751
        %v753 = vcombine.low %v697, %v713
        %v754 = vcombine.high %v697, %v713
        %v756 = vunpack.c.l.s4 1934713408
        %v757 = vunpack.c.0.s8 %v756
        %v758 = vlaneseq
        %v759 = vshrl.u32 %v758, 7
        %v760 = vsub.s32 %v757, %v759
        %v761 = vrot.slane %v753, %v760
        %v763 = vunpack.c.l.s4 1934713408
        %v764 = vunpack.c.0.s8 %v763
        %v765 = vlaneseq
        %v766 = vshrl.u32 %v765, 7
        %v767 = vsub.s32 %v764, %v766
        %v768 = vrot.slane %v754, %v767
        %v769 = vcombine.low %v704, %v720
        %v770 = vcombine.high %v704, %v720
        %v772 = vunpack.c.l.s4 1934713408
        %v773 = vunpack.c.0.s8 %v772
        %v774 = vlaneseq
        %v775 = vshrl.u32 %v774, 7
        %v776 = vsub.s32 %v773, %v775
        %v777 = vrot.slane %v769, %v776
        %v779 = vunpack.c.l.s4 1934713408
        %v780 = vunpack.c.0.s8 %v779
        %v781 = vlaneseq
        %v782 = vshrl.u32 %v781, 7
        %v783 = vsub.s32 %v780, %v782
        %v784 = vrot.slane %v770, %v783
        %v785 = vcombine.low %v729, %v761
        %v786 = vcombine.high %v729, %v761
        %v787 = vcombine.low %v736, %v768
        %v788 = vcombine.high %v736, %v768
        %v789 = vcombine.low %v745, %v777
        %v790 = vcombine.high %v745, %v777
        %v791 = vcombine.low %v752, %v784
        %v792 = vcombine.high %v752, %v784
        %v793 = vcombine.low %v629, %v636
        %v795 = vunpack.c.l.s4 1983009808
        %v796 = vunpack.c.0.s8 %v795
        %v797 = vlaneseq
        %v798 = vshrl.u32 %v797, 7
        %v799 = vsub.s32 %v796, %v798
        %v800 = vrot.slane %v793, %v799
        %v801 = vcombine.low %v653, %v654
        %v803 = vunpack.c.l.s4 1983009808
        %v804 = vunpack.c.0.s8 %v803
        %v805 = vlaneseq
        %v806 = vshrl.u32 %v805, 7
        %v807 = vsub.s32 %v804, %v806
        %v808 = vrot.slane %v801, %v807
        %v809 = vcombine.low %v645, %v652
        %v811 = vunpack.c.l.s4 1983009808
        %v812 = vunpack.c.0.s8 %v811
        %v813 = vlaneseq
        %v814 = vshrl.u32 %v813, 7
        %v815 = vsub.s32 %v812, %v814
        %v816 = vrot.slane %v809, %v815
        %v817 = vcombine.low %v655, %v656
        %v819 = vunpack.c.l.s4 1983009808
        %v820 = vunpack.c.0.s8 %v819
        %v821 = vlaneseq
        %v822 = vshrl.u32 %v821, 7
        %v823 = vsub.s32 %v820, %v822
        %v824 = vrot.slane %v817, %v823
        %v825 = vcombine.low %v800, %v808
        %v826 = vcombine.high %v800, %v808
        %v828 = vunpack.c.l.s4 1934713408
        %v829 = vunpack.c.0.s8 %v828
        %v830 = vlaneseq
        %v831 = vshrl.u32 %v830, 7
        %v832 = vsub.s32 %v829, %v831
        %v833 = vrot.slane %v825, %v832
        %v835 = vunpack.c.l.s4 1934713408
        %v836 = vunpack.c.0.s8 %v835
        %v837 = vlaneseq
        %v838 = vshrl.u32 %v837, 7
        %v839 = vsub.s32 %v836, %v838
        %v840 = vrot.slane %v826, %v839
        %v841 = vcombine.low %v816, %v824
        %v842 = vcombine.high %v816, %v824
        %v844 = vunpack.c.l.s4 1934713408
        %v845 = vunpack.c.0.s8 %v844
        %v846 = vlaneseq
        %v847 = vshrl.u32 %v846, 7
        %v848 = vsub.s32 %v845, %v847
        %v849 = vrot.slane %v841, %v848
        %v851 = vunpack.c.l.s4 1934713408
        %v852 = vunpack.c.0.s8 %v851
        %v853 = vlaneseq
        %v854 = vshrl.u32 %v853, 7
        %v855 = vsub.s32 %v852, %v854
        %v856 = vrot.slane %v842, %v855
        %v857 = vcombine.low %v833, %v849
        %v858 = vcombine.high %v833, %v849
        %v859 = vcombine.low %v840, %v856
        %v860 = vcombine.high %v840, %v856
        %v861 = vpack.c.bf16 %v785, %v785
        %v862 = vpack.c.bf16 %v786, %v786
        %v863 = vpack.c.bf16 %v787, %v787
        %v864 = vpack.c.bf16 %v788, %v788
        %v865 = vpack.c.bf16 %v789, %v789
        %v866 = vpack.c.bf16 %v790, %v790
        %v867 = vpack.c.bf16 %v791, %v791
        %v868 = vpack.c.bf16 %v792, %v792
        %v869 = vpack.c.bf16 %v857, %v857
        %v870 = vpack.c.bf16 %v858, %v858
        %v871 = vpack.c.bf16 %v859, %v859
        %v872 = vpack.c.bf16 %v860, %v860
        %vm873 = vcmask 64512
        %v875 = vsel %vm873, %v861, 0
        %v878 = vsel %vm873, %v865, 0
        %880 = vmatprep.subr.bf16.mxu0 0
        %881 = vmatpush1.bf16.xpose.msra.mxu0 %v878
        %882 = vmatprep.subr.bf16.mxu0 0
        %883 = vmatpush1.bf16.xpose.msra.mxu0 0
        %884 = vmatprep.subr.bf16.mxu0 0
        %885 = vmatpush1.bf16.xpose.msra.mxu0 0
        %886 = vmatprep.subr.bf16.mxu0 0
        %887 = vmatpush1.bf16.xpose.msra.mxu0 0
        %888 = vmatprep.subr.bf16.mxu0 0
        %889 = vmatpush1.bf16.xpose.msra.mxu0 0
        %890 = vmatprep.subr.bf16.mxu0 0
        %891 = vmatpush1.bf16.xpose.msra.mxu0 0
        %892 = vmatprep.subr.bf16.mxu0 0
        %893 = vmatpush1.bf16.xpose.msra.mxu0 0
        %894 = vmatprep.subr.bf16.mxu0 0
        %895 = vmatpush1.bf16.xpose.msra.mxu0 0
        %896 = vmatprep.subr.bf16.mxu0 0
        %897 = vmatpush1.bf16.xpose.msra.mxu0 0
        %898 = vmatprep.subr.bf16.mxu0 0
        %899 = vmatpush1.bf16.xpose.msra.mxu0 0
        %900 = vmatprep.subr.bf16.mxu0 0
        %901 = vmatpush1.bf16.xpose.msra.mxu0 0
        %902 = vmatprep.subr.bf16.mxu0 0
        %903 = vmatpush1.bf16.xpose.msra.mxu0 0
        %904 = vmatprep.subr.bf16.mxu0 0
        %905 = vmatpush1.bf16.xpose.msra.mxu0 0
        %906 = vmatprep.subr.bf16.mxu0 0
        %907 = vmatpush1.bf16.xpose.msra.mxu0 0
        %908 = vmatprep.subr.bf16.mxu0 0
        %909 = vmatpush1.bf16.xpose.msra.mxu0 0
        %910 = vmatprep.subr.bf16.mxu0 0
        %911 = vmatpush1.bf16.xpose.msra.mxu0 0
        %912 = vmatprep.mubr.bf16.mxu0 0
        %913 = vmatmul.mubr.bf16.gmra.mrb[0].mxu0 %v875
        %v914 = vpop.f32.mrb[0].mxu0
        %v915 = vadd.f32 0.0, %v914
        %v916 = vpop.f32.mrb[0].mxu0
        %v917 = vpop.f32.mrb[0].mxu0
        %v918 = vpop.f32.mrb[0].mxu0
        %919 = vdwg.mxu0
        %v921 = vsel %vm873, %v862, 0
        %v924 = vsel %vm873, %v866, 0
        %926 = vmatprep.subr.bf16.mxu0 0
        %927 = vmatpush1.bf16.xpose.msra.mxu0 %v924
        %928 = vmatprep.subr.bf16.mxu0 0
        %929 = vmatpush1.bf16.xpose.msra.mxu0 0
        %930 = vmatprep.subr.bf16.mxu0 0
        %931 = vmatpush1.bf16.xpose.msra.mxu0 0
        %932 = vmatprep.subr.bf16.mxu0 0
        %933 = vmatpush1.bf16.xpose.msra.mxu0 0
        %934 = vmatprep.subr.bf16.mxu0 0
        %935 = vmatpush1.bf16.xpose.msra.mxu0 0
        %936 = vmatprep.subr.bf16.mxu0 0
        %937 = vmatpush1.bf16.xpose.msra.mxu0 0
        %938 = vmatprep.subr.bf16.mxu0 0
        %939 = vmatpush1.bf16.xpose.msra.mxu0 0
        %940 = vmatprep.subr.bf16.mxu0 0
        %941 = vmatpush1.bf16.xpose.msra.mxu0 0
        %942 = vmatprep.subr.bf16.mxu0 0
        %943 = vmatpush1.bf16.xpose.msra.mxu0 0
        %944 = vmatprep.subr.bf16.mxu0 0
        %945 = vmatpush1.bf16.xpose.msra.mxu0 0
        %946 = vmatprep.subr.bf16.mxu0 0
        %947 = vmatpush1.bf16.xpose.msra.mxu0 0
        %948 = vmatprep.subr.bf16.mxu0 0
        %949 = vmatpush1.bf16.xpose.msra.mxu0 0
        %950 = vmatprep.subr.bf16.mxu0 0
        %951 = vmatpush1.bf16.xpose.msra.mxu0 0
        %952 = vmatprep.subr.bf16.mxu0 0
        %953 = vmatpush1.bf16.xpose.msra.mxu0 0
        %954 = vmatprep.subr.bf16.mxu0 0
        %955 = vmatpush1.bf16.xpose.msra.mxu0 0
        %956 = vmatprep.subr.bf16.mxu0 0
        %957 = vmatpush1.bf16.xpose.msra.mxu0 0
        %958 = vmatprep.mubr.bf16.mxu0 0
        %959 = vmatmul.mubr.bf16.gmra.mrb[0].mxu0 %v921
        %v960 = vpop.f32.mrb[0].mxu0
        %v961 = vadd.f32 0.0, %v960
        %v962 = vpop.f32.mrb[0].mxu0
        %v963 = vpop.f32.mrb[0].mxu0
        %v964 = vpop.f32.mrb[0].mxu0
        %965 = vdwg.mxu0
        %v967 = vsel %vm873, %v863, 0
        %v970 = vsel %vm873, %v867, 0
        %972 = vmatprep.subr.bf16.mxu0 0
        %973 = vmatpush1.bf16.xpose.msra.mxu0 %v970
        %974 = vmatprep.subr.bf16.mxu0 0
        %975 = vmatpush1.bf16.xpose.msra.mxu0 0
        %976 = vmatprep.subr.bf16.mxu0 0
        %977 = vmatpush1.bf16.xpose.msra.mxu0 0
        %978 = vmatprep.subr.bf16.mxu0 0
        %979 = vmatpush1.bf16.xpose.msra.mxu0 0
        %980 = vmatprep.subr.bf16.mxu0 0
        %981 = vmatpush1.bf16.xpose.msra.mxu0 0
        %982 = vmatprep.subr.bf16.mxu0 0
        %983 = vmatpush1.bf16.xpose.msra.mxu0 0
        %984 = vmatprep.subr.bf16.mxu0 0
        %985 = vmatpush1.bf16.xpose.msra.mxu0 0
        %986 = vmatprep.subr.bf16.mxu0 0
        %987 = vmatpush1.bf16.xpose.msra.mxu0 0
        %988 = vmatprep.subr.bf16.mxu0 0
        %989 = vmatpush1.bf16.xpose.msra.mxu0 0
        %990 = vmatprep.subr.bf16.mxu0 0
        %991 = vmatpush1.bf16.xpose.msra.mxu0 0
        %992 = vmatprep.subr.bf16.mxu0 0
        %993 = vmatpush1.bf16.xpose.msra.mxu0 0
        %994 = vmatprep.subr.bf16.mxu0 0
        %995 = vmatpush1.bf16.xpose.msra.mxu0 0
        %996 = vmatprep.subr.bf16.mxu0 0
        %997 = vmatpush1.bf16.xpose.msra.mxu0 0
        %998 = vmatprep.subr.bf16.mxu0 0
        %999 = vmatpush1.bf16.xpose.msra.mxu0 0
        %1000 = vmatprep.subr.bf16.mxu0 0
        %1001 = vmatpush1.bf16.xpose.msra.mxu0 0
        %1002 = vmatprep.subr.bf16.mxu0 0
        %1003 = vmatpush1.bf16.xpose.msra.mxu0 0
        %1004 = vmatprep.mubr.bf16.mxu0 0
        %1005 = vmatmul.mubr.bf16.gmra.mrb[0].mxu0 %v967
        %v1006 = vpop.f32.mrb[0].mxu0
        %v1007 = vadd.f32 0.0, %v1006
        %v1008 = vpop.f32.mrb[0].mxu0
        %v1009 = vpop.f32.mrb[0].mxu0
        %v1010 = vpop.f32.mrb[0].mxu0
        %1011 = vdwg.mxu0
        %v1013 = vsel %vm873, %v864, 0
        %v1016 = vsel %vm873, %v868, 0
        %1018 = vmatprep.subr.bf16.mxu0 0
        %1019 = vmatpush1.bf16.xpose.msra.mxu0 %v1016
        %1020 = vmatprep.subr.bf16.mxu0 0
        %1021 = vmatpush1.bf16.xpose.msra.mxu0 0
        %1022 = vmatprep.subr.bf16.mxu0 0
        %1023 = vmatpush1.bf16.xpose.msra.mxu0 0
        %1024 = vmatprep.subr.bf16.mxu0 0
        %1025 = vmatpush1.bf16.xpose.msra.mxu0 0
        %1026 = vmatprep.subr.bf16.mxu0 0
        %1027 = vmatpush1.bf16.xpose.msra.mxu0 0
        %1028 = vmatprep.subr.bf16.mxu0 0
        %1029 = vmatpush1.bf16.xpose.msra.mxu0 0
        %1030 = vmatprep.subr.bf16.mxu0 0
        %1031 = vmatpush1.bf16.xpose.msra.mxu0 0
        %1032 = vmatprep.subr.bf16.mxu0 0
        %1033 = vmatpush1.bf16.xpose.msra.mxu0 0
        %1034 = vmatprep.subr.bf16.mxu0 0
        %1035 = vmatpush1.bf16.xpose.msra.mxu0 0
        %1036 = vmatprep.subr.bf16.mxu0 0
        %1037 = vmatpush1.bf16.xpose.msra.mxu0 0
        %1038 = vmatprep.subr.bf16.mxu0 0
        %1039 = vmatpush1.bf16.xpose.msra.mxu0 0
        %1040 = vmatprep.subr.bf16.mxu0 0
        %1041 = vmatpush1.bf16.xpose.msra.mxu0 0
        %1042 = vmatprep.subr.bf16.mxu0 0
        %1043 = vmatpush1.bf16.xpose.msra.mxu0 0
        %1044 = vmatprep.subr.bf16.mxu0 0
        %1045 = vmatpush1.bf16.xpose.msra.mxu0 0
        %1046 = vmatprep.subr.bf16.mxu0 0
        %1047 = vmatpush1.bf16.xpose.msra.mxu0 0
        %1048 = vmatprep.subr.bf16.mxu0 0
        %1049 = vmatpush1.bf16.xpose.msra.mxu0 0
        %1050 = vmatprep.mubr.bf16.mxu0 0
        %1051 = vmatmul.mubr.bf16.gmra.mrb[0].mxu0 %v1013
        %v1052 = vpop.f32.mrb[0].mxu0
        %v1053 = vadd.f32 0.0, %v1052
        %v1054 = vpop.f32.mrb[0].mxu0
        %v1055 = vpop.f32.mrb[0].mxu0
        %v1056 = vpop.f32.mrb[0].mxu0
        %1057 = vdwg.mxu0
        %v1058 = vsel %vm873, %v915, -inf
        %1059 = vmax.xlane.f32.xlu0 %v1058
        %v1060 = vpop.xlane.xlu0 %1059
        %v1061 = vsel %vm873, %v961, -inf
        %1062 = vmax.xlane.f32.xlu0 %v1061
        %v1063 = vpop.xlane.xlu0 %1062
        %v1064 = vsel %vm873, %v1007, -inf
        %1065 = vmax.xlane.f32.xlu0 %v1064
        %v1066 = vpop.xlane.xlu0 %1065
        %v1067 = vsel %vm873, %v1053, -inf
        %1068 = vmax.xlane.f32.xlu0 %v1067
        %v1069 = vpop.xlane.xlu0 %1068
        %v1070 = vsub.f32 %v915, %v1060
        %v1071 = vsub.f32 %v961, %v1063
        %v1072 = vsub.f32 %v1007, %v1066
        %v1073 = vsub.f32 %v1053, %v1069
        %v1074 = vmul.f32 %v1070, 1.442695
        %v1075 = vpow.pop %v1074
        %v1076 = vmul.f32 %v1071, 1.442695
        %v1077 = vpow.pop %v1076
        %v1078 = vmul.f32 %v1072, 1.442695
        %v1079 = vpow.pop %v1078
        %v1080 = vmul.f32 %v1073, 1.442695
        %v1081 = vpow.pop %v1080
        %v1082 = vsel %vm873, %v1075, 0.0
        %1083 = vadd.xlane.f32.xlu0 %v1082
        %v1084 = vpop.xlane.xlu0 %1083
        %v1085 = vsel %vm873, %v1077, 0.0
        %1086 = vadd.xlane.f32.xlu0 %v1085
        %v1087 = vpop.xlane.xlu0 %1086
        %v1088 = vsel %vm873, %v1079, 0.0
        %1089 = vadd.xlane.f32.xlu0 %v1088
        %v1090 = vpop.xlane.xlu0 %1089
        %v1091 = vsel %vm873, %v1081, 0.0
        %1092 = vadd.xlane.f32.xlu0 %v1091
        %v1093 = vpop.xlane.xlu0 %1092
        %v1094 = vrcp.pop %v1084
        %v1095 = vrcp.pop %v1087
        %v1096 = vrcp.pop %v1090
        %v1097 = vrcp.pop %v1093
        %v1098 = vmul.f32 %v1075, %v1094
        %v1099 = vmul.f32 %v1077, %v1095
        %v1100 = vmul.f32 %v1079, %v1096
        %v1101 = vmul.f32 %v1081, %v1097
        %v1102 = vpack.c.bf16 %v1098, %v1098
        %v1103 = vpack.c.bf16 %v1099, %v1099
        %v1104 = vpack.c.bf16 %v1100, %v1100
        %v1105 = vpack.c.bf16 %v1101, %v1101
        %v1107 = vsel %vm873, %v1102, 0
        %vm1109 = vcmask 1043456
        %v1111 = vsel %vm1109, %v869, 0
        %1113 = vmatprep.subr.bf16.mxu0 0
        %1114 = vmatpush1.bf16.msra.mxu0 %v1111
        %1115 = vmatprep.subr.bf16.mxu0 0
        %1116 = vmatpush1.bf16.msra.mxu0 0
        %1117 = vmatprep.subr.bf16.mxu0 0
        %1118 = vmatpush1.bf16.msra.mxu0 0
        %1119 = vmatprep.subr.bf16.mxu0 0
        %1120 = vmatpush1.bf16.msra.mxu0 0
        %1121 = vmatprep.subr.bf16.mxu0 0
        %1122 = vmatpush1.bf16.msra.mxu0 0
        %1123 = vmatprep.subr.bf16.mxu0 0
        %1124 = vmatpush1.bf16.msra.mxu0 0
        %1125 = vmatprep.subr.bf16.mxu0 0
        %1126 = vmatpush1.bf16.msra.mxu0 0
        %1127 = vmatprep.subr.bf16.mxu0 0
        %1128 = vmatpush1.bf16.msra.mxu0 0
        %1129 = vmatprep.subr.bf16.mxu0 0
        %1130 = vmatpush1.bf16.msra.mxu0 0
        %1131 = vmatprep.subr.bf16.mxu0 0
        %1132 = vmatpush1.bf16.msra.mxu0 0
        %1133 = vmatprep.subr.bf16.mxu0 0
        %1134 = vmatpush1.bf16.msra.mxu0 0
        %1135 = vmatprep.subr.bf16.mxu0 0
        %1136 = vmatpush1.bf16.msra.mxu0 0
        %1137 = vmatprep.subr.bf16.mxu0 0
        %1138 = vmatpush1.bf16.msra.mxu0 0
        %1139 = vmatprep.subr.bf16.mxu0 0
        %1140 = vmatpush1.bf16.msra.mxu0 0
        %1141 = vmatprep.subr.bf16.mxu0 0
        %1142 = vmatpush1.bf16.msra.mxu0 0
        %1143 = vmatprep.subr.bf16.mxu0 0
        %1144 = vmatpush1.bf16.msra.mxu0 0
        %1145 = vmatprep.mubr.bf16.mxu0 0
        %1146 = vmatmul.mubr.bf16.gmra.mrb[0].mxu0 %v1107
        %v1147 = vpop.f32.mrb[0].mxu0
        %v1148 = vadd.f32 0.0, %v1147
        %v1149 = vpop.f32.mrb[0].mxu0
        %v1150 = vpop.f32.mrb[0].mxu0
        %v1151 = vpop.f32.mrb[0].mxu0
        %1152 = vdwg.mxu0
        %v1154 = vsel %vm873, %v1103, 0
        %v1157 = vsel %vm1109, %v870, 0
        %1159 = vmatprep.subr.bf16.mxu0 0
        %1160 = vmatpush1.bf16.msra.mxu0 %v1157
        %1161 = vmatprep.subr.bf16.mxu0 0
        %1162 = vmatpush1.bf16.msra.mxu0 0
        %1163 = vmatprep.subr.bf16.mxu0 0
        %1164 = vmatpush1.bf16.msra.mxu0 0
        %1165 = vmatprep.subr.bf16.mxu0 0
        %1166 = vmatpush1.bf16.msra.mxu0 0
        %1167 = vmatprep.subr.bf16.mxu0 0
        %1168 = vmatpush1.bf16.msra.mxu0 0
        %1169 = vmatprep.subr.bf16.mxu0 0
        %1170 = vmatpush1.bf16.msra.mxu0 0
        %1171 = vmatprep.subr.bf16.mxu0 0
        %1172 = vmatpush1.bf16.msra.mxu0 0
        %1173 = vmatprep.subr.bf16.mxu0 0
        %1174 = vmatpush1.bf16.msra.mxu0 0
        %1175 = vmatprep.subr.bf16.mxu0 0
        %1176 = vmatpush1.bf16.msra.mxu0 0
        %1177 = vmatprep.subr.bf16.mxu0 0
        %1178 = vmatpush1.bf16.msra.mxu0 0
        %1179 = vmatprep.subr.bf16.mxu0 0
        %1180 = vmatpush1.bf16.msra.mxu0 0
        %1181 = vmatprep.subr.bf16.mxu0 0
        %1182 = vmatpush1.bf16.msra.mxu0 0
        %1183 = vmatprep.subr.bf16.mxu0 0
        %1184 = vmatpush1.bf16.msra.mxu0 0
        %1185 = vmatprep.subr.bf16.mxu0 0
        %1186 = vmatpush1.bf16.msra.mxu0 0
        %1187 = vmatprep.subr.bf16.mxu0 0
        %1188 = vmatpush1.bf16.msra.mxu0 0
        %1189 = vmatprep.subr.bf16.mxu0 0
        %1190 = vmatpush1.bf16.msra.mxu0 0
        %1191 = vmatprep.mubr.bf16.mxu0 0
        %1192 = vmatmul.mubr.bf16.gmra.mrb[0].mxu0 %v1154
        %v1193 = vpop.f32.mrb[0].mxu0
        %v1194 = vadd.f32 0.0, %v1193
        %v1195 = vpop.f32.mrb[0].mxu0
        %v1196 = vpop.f32.mrb[0].mxu0
        %v1197 = vpop.f32.mrb[0].mxu0
        %1198 = vdwg.mxu0
        %v1200 = vsel %vm873, %v1104, 0
        %v1203 = vsel %vm1109, %v871, 0
        %1205 = vmatprep.subr.bf16.mxu0 0
        %1206 = vmatpush1.bf16.msra.mxu0 %v1203
        %1207 = vmatprep.subr.bf16.mxu0 0
        %1208 = vmatpush1.bf16.msra.mxu0 0
        %1209 = vmatprep.subr.bf16.mxu0 0
        %1210 = vmatpush1.bf16.msra.mxu0 0
        %1211 = vmatprep.subr.bf16.mxu0 0
        %1212 = vmatpush1.bf16.msra.mxu0 0
        %1213 = vmatprep.subr.bf16.mxu0 0
        %1214 = vmatpush1.bf16.msra.mxu0 0
        %1215 = vmatprep.subr.bf16.mxu0 0
        %1216 = vmatpush1.bf16.msra.mxu0 0
        %1217 = vmatprep.subr.bf16.mxu0 0
        %1218 = vmatpush1.bf16.msra.mxu0 0
        %1219 = vmatprep.subr.bf16.mxu0 0
        %1220 = vmatpush1.bf16.msra.mxu0 0
        %1221 = vmatprep.subr.bf16.mxu0 0
        %1222 = vmatpush1.bf16.msra.mxu0 0
        %1223 = vmatprep.subr.bf16.mxu0 0
        %1224 = vmatpush1.bf16.msra.mxu0 0
        %1225 = vmatprep.subr.bf16.mxu0 0
        %1226 = vmatpush1.bf16.msra.mxu0 0
        %1227 = vmatprep.subr.bf16.mxu0 0
        %1228 = vmatpush1.bf16.msra.mxu0 0
        %1229 = vmatprep.subr.bf16.mxu0 0
        %1230 = vmatpush1.bf16.msra.mxu0 0
        %1231 = vmatprep.subr.bf16.mxu0 0
        %1232 = vmatpush1.bf16.msra.mxu0 0
        %1233 = vmatprep.subr.bf16.mxu0 0
        %1234 = vmatpush1.bf16.msra.mxu0 0
        %1235 = vmatprep.subr.bf16.mxu0 0
        %1236 = vmatpush1.bf16.msra.mxu0 0
        %1237 = vmatprep.mubr.bf16.mxu0 0
        %1238 = vmatmul.mubr.bf16.gmra.mrb[0].mxu0 %v1200
        %v1239 = vpop.f32.mrb[0].mxu0
        %v1240 = vadd.f32 0.0, %v1239
        %v1241 = vpop.f32.mrb[0].mxu0
        %v1242 = vpop.f32.mrb[0].mxu0
        %v1243 = vpop.f32.mrb[0].mxu0
        %1244 = vdwg.mxu0
        %v1246 = vsel %vm873, %v1105, 0
        %v1249 = vsel %vm1109, %v872, 0
        %1251 = vmatprep.subr.bf16.mxu0 0
        %1252 = vmatpush1.bf16.msra.mxu0 %v1249
        %1253 = vmatprep.subr.bf16.mxu0 0
        %1254 = vmatpush1.bf16.msra.mxu0 0
        %1255 = vmatprep.subr.bf16.mxu0 0
        %1256 = vmatpush1.bf16.msra.mxu0 0
        %1257 = vmatprep.subr.bf16.mxu0 0
        %1258 = vmatpush1.bf16.msra.mxu0 0
        %1259 = vmatprep.subr.bf16.mxu0 0
        %1260 = vmatpush1.bf16.msra.mxu0 0
        %1261 = vmatprep.subr.bf16.mxu0 0
        %1262 = vmatpush1.bf16.msra.mxu0 0
        %1263 = vmatprep.subr.bf16.mxu0 0
        %1264 = vmatpush1.bf16.msra.mxu0 0
        %1265 = vmatprep.subr.bf16.mxu0 0
        %1266 = vmatpush1.bf16.msra.mxu0 0
        %1267 = vmatprep.subr.bf16.mxu0 0
        %1268 = vmatpush1.bf16.msra.mxu0 0
        %1269 = vmatprep.subr.bf16.mxu0 0
        %1270 = vmatpush1.bf16.msra.mxu0 0
        %1271 = vmatprep.subr.bf16.mxu0 0
        %1272 = vmatpush1.bf16.msra.mxu0 0
        %1273 = vmatprep.subr.bf16.mxu0 0
        %1274 = vmatpush1.bf16.msra.mxu0 0
        %1275 = vmatprep.subr.bf16.mxu0 0
        %1276 = vmatpush1.bf16.msra.mxu0 0
        %1277 = vmatprep.subr.bf16.mxu0 0
        %1278 = vmatpush1.bf16.msra.mxu0 0
        %1279 = vmatprep.subr.bf16.mxu0 0
        %1280 = vmatpush1.bf16.msra.mxu0 0
        %1281 = vmatprep.subr.bf16.mxu0 0
        %1282 = vmatpush1.bf16.msra.mxu0 0
        %1283 = vmatprep.mubr.bf16.mxu0 0
        %1284 = vmatmul.mubr.bf16.gmra.mrb[0].mxu0 %v1246
        %v1285 = vpop.f32.mrb[0].mxu0
        %v1286 = vadd.f32 0.0, %v1285
        %v1287 = vpop.f32.mrb[0].mxu0
        %v1288 = vpop.f32.mrb[0].mxu0
        %v1289 = vpop.f32.mrb[0].mxu0
        %1290 = vdwg.mxu0
        %v1291 = vcombine.low %v1148, %v1240
        %v1292 = vcombine.high %v1148, %v1240
        %v1294 = vunpack.c.l.s4 1983009808
        %v1295 = vunpack.c.0.s8 %v1294
        %v1296 = vlaneseq
        %v1297 = vshrl.u32 %v1296, 7
        %v1298 = vsub.s32 %v1295, %v1297
        %v1299 = vrot.slane %v1291, %v1298
        %v1301 = vunpack.c.l.s4 1983009808
        %v1302 = vunpack.c.0.s8 %v1301
        %v1303 = vlaneseq
        %v1304 = vshrl.u32 %v1303, 7
        %v1305 = vsub.s32 %v1302, %v1304
        %v1306 = vrot.slane %v1292, %v1305
        %v1307 = vcombine.low %v1194, %v1286
        %v1308 = vcombine.high %v1194, %v1286
        %v1310 = vunpack.c.l.s4 1983009808
        %v1311 = vunpack.c.0.s8 %v1310
        %v1312 = vlaneseq
        %v1313 = vshrl.u32 %v1312, 7
        %v1314 = vsub.s32 %v1311, %v1313
        %v1315 = vrot.slane %v1307, %v1314
        %v1317 = vunpack.c.l.s4 1983009808
        %v1318 = vunpack.c.0.s8 %v1317
        %v1319 = vlaneseq
        %v1320 = vshrl.u32 %v1319, 7
        %v1321 = vsub.s32 %v1318, %v1320
        %v1322 = vrot.slane %v1308, %v1321
        %v1323 = vcombine.low %v1299, %v1315
        %v1324 = vcombine.high %v1299, %v1315
        %v1326 = vunpack.c.l.s4 1934713408
        %v1327 = vunpack.c.0.s8 %v1326
        %v1328 = vlaneseq
        %v1329 = vshrl.u32 %v1328, 7
        %v1330 = vsub.s32 %v1327, %v1329
        %v1331 = vrot.slane %v1323, %v1330
        %v1333 = vunpack.c.l.s4 1934713408
        %v1334 = vunpack.c.0.s8 %v1333
        %v1335 = vlaneseq
        %v1336 = vshrl.u32 %v1335, 7
        %v1337 = vsub.s32 %v1334, %v1336
        %v1338 = vrot.slane %v1324, %v1337
        %v1339 = vcombine.low %v1306, %v1322
        %v1340 = vcombine.high %v1306, %v1322
        %v1342 = vunpack.c.l.s4 1934713408
        %v1343 = vunpack.c.0.s8 %v1342
        %v1344 = vlaneseq
        %v1345 = vshrl.u32 %v1344, 7
        %v1346 = vsub.s32 %v1343, %v1345
        %v1347 = vrot.slane %v1339, %v1346
        %v1349 = vunpack.c.l.s4 1934713408
        %v1350 = vunpack.c.0.s8 %v1349
        %v1351 = vlaneseq
        %v1352 = vshrl.u32 %v1351, 7
        %v1353 = vsub.s32 %v1350, %v1352
        %v1354 = vrot.slane %v1340, %v1353
        %v1355 = vcombine.high %v1331, 0.0
        %v1356 = vcombine.high %v1338, 0.0
        %v1357 = vcombine.high %v1347, 0.0
        %v1358 = vcombine.high %v1354, 0.0
        %v1359 = vcombine.low %v1331, %v1338
        %v1361 = vunpack.c.l.s4 1983009808
        %v1362 = vunpack.c.0.s8 %v1361
        %v1363 = vlaneseq
        %v1364 = vshrl.u32 %v1363, 7
        %v1365 = vsub.s32 %v1362, %v1364
        %v1366 = vrot.slane %v1359, %v1365
        %v1367 = vcombine.low %v1355, %v1356
        %v1369 = vunpack.c.l.s4 1983009808
        %v1370 = vunpack.c.0.s8 %v1369
        %v1371 = vlaneseq
        %v1372 = vshrl.u32 %v1371, 7
        %v1373 = vsub.s32 %v1370, %v1372
        %v1374 = vrot.slane %v1367, %v1373
        %v1375 = vcombine.low %v1347, %v1354
        %v1377 = vunpack.c.l.s4 1983009808
        %v1378 = vunpack.c.0.s8 %v1377
        %v1379 = vlaneseq
        %v1380 = vshrl.u32 %v1379, 7
        %v1381 = vsub.s32 %v1378, %v1380
        %v1382 = vrot.slane %v1375, %v1381
        %v1383 = vcombine.low %v1357, %v1358
        %v1385 = vunpack.c.l.s4 1983009808
        %v1386 = vunpack.c.0.s8 %v1385
        %v1387 = vlaneseq
        %v1388 = vshrl.u32 %v1387, 7
        %v1389 = vsub.s32 %v1386, %v1388
        %v1390 = vrot.slane %v1383, %v1389
        %v1391 = vcombine.low %v1366, %v1374
        %v1392 = vcombine.high %v1366, %v1374
        %v1394 = vunpack.c.l.s4 1934713408
        %v1395 = vunpack.c.0.s8 %v1394
        %v1396 = vlaneseq
        %v1397 = vshrl.u32 %v1396, 7
        %v1398 = vsub.s32 %v1395, %v1397
        %v1399 = vrot.slane %v1391, %v1398
        %v1401 = vunpack.c.l.s4 1934713408
        %v1402 = vunpack.c.0.s8 %v1401
        %v1403 = vlaneseq
        %v1404 = vshrl.u32 %v1403, 7
        %v1405 = vsub.s32 %v1402, %v1404
        %v1406 = vrot.slane %v1392, %v1405
        %v1407 = vcombine.low %v1382, %v1390
        %v1408 = vcombine.high %v1382, %v1390
        %v1410 = vunpack.c.l.s4 1934713408
        %v1411 = vunpack.c.0.s8 %v1410
        %v1412 = vlaneseq
        %v1413 = vshrl.u32 %v1412, 7
        %v1414 = vsub.s32 %v1411, %v1413
        %v1415 = vrot.slane %v1407, %v1414
        %v1417 = vunpack.c.l.s4 1934713408
        %v1418 = vunpack.c.0.s8 %v1417
        %v1419 = vlaneseq
        %v1420 = vshrl.u32 %v1419, 7
        %v1421 = vsub.s32 %v1418, %v1420
        %v1422 = vrot.slane %v1408, %v1421
        %v1423 = vcombine.low %v1399, %v1415
        %v1424 = vcombine.high %v1399, %v1415
        %v1425 = vcombine.low %v1406, %v1422
        %v1426 = vcombine.high %v1406, %v1422
        %1428 = vrot.lane.b32.xlu0 %v1424, 8
        %v1429 = vpop.permute.xlu0 %1428
        %1432 = vrot.lane.b32.xlu0 %v1425, 16
        %v1433 = vpop.permute.xlu0 %1432
        %1436 = vrot.lane.b32.xlu0 %v1426, 24
        %v1437 = vpop.permute.xlu0 %1436
        %v1439 = vsel %vm873, %v1423, %v1429
        %vm1440 = vcmask 130048
        %v1441 = vsel %vm1440, %v1439, %v1433
        %vm1442 = vcmask 195584
        %v1443 = vsel %vm1442, %v1441, %v1437
        %v1444 = vpack.c.bf16 %v1443, %v1443
        %v1449 = vunpack.c.l.b16 %v307
        %v1450 = vunpack.c.l.b16 %v308
        %v1451 = vunpack.c.l.b16 %v309
        %v1452 = vunpack.c.l.b16 %v310
        %v1453 = vpack.c.b16 %v1450, %v1449
        %v1454 = vpack.c.b16 %v1452, %v1451
        %v1458 = vsel %vm375, %v1444, 0
        %1460 = vmatprep.subr.bf16.mxu0 0
        %1461 = vmatpush1.bf16.msra.mxu0 %v1453
        %1462 = vmatprep.subr.bf16.mxu0 0
        %1463 = vmatpush1.bf16.msra.mxu0 %v1454
        %1464 = vmatprep.subr.bf16.mxu0 0
        %1465 = vmatpush1.bf16.msra.mxu0 0
        %1466 = vmatprep.subr.bf16.mxu0 0
        %1467 = vmatpush1.bf16.msra.mxu0 0
        %1468 = vmatprep.subr.bf16.mxu0 0
        %1469 = vmatpush1.bf16.msra.mxu0 0
        %1470 = vmatprep.subr.bf16.mxu0 0
        %1471 = vmatpush1.bf16.msra.mxu0 0
        %1472 = vmatprep.subr.bf16.mxu0 0
        %1473 = vmatpush1.bf16.msra.mxu0 0
        %1474 = vmatprep.subr.bf16.mxu0 0
        %1475 = vmatpush1.bf16.msra.mxu0 0
        %1476 = vmatprep.subr.bf16.mxu0 0
        %1477 = vmatpush1.bf16.msra.mxu0 0
        %1478 = vmatprep.subr.bf16.mxu0 0
        %1479 = vmatpush1.bf16.msra.mxu0 0
        %1480 = vmatprep.subr.bf16.mxu0 0
        %1481 = vmatpush1.bf16.msra.mxu0 0
        %1482 = vmatprep.subr.bf16.mxu0 0
        %1483 = vmatpush1.bf16.msra.mxu0 0
        %1484 = vmatprep.subr.bf16.mxu0 0
        %1485 = vmatpush1.bf16.msra.mxu0 0
        %1486 = vmatprep.subr.bf16.mxu0 0
        %1487 = vmatpush1.bf16.msra.mxu0 0
        %1488 = vmatprep.subr.bf16.mxu0 0
        %1489 = vmatpush1.bf16.msra.mxu0 0
        %1490 = vmatprep.subr.bf16.mxu0 0
        %1491 = vmatpush1.bf16.msra.mxu0 0
        %1492 = vmatprep.mubr.bf16.mxu0 0
        %1493 = vmatmul.mubr.bf16.gmra.mrb[0].mxu0 %v1458
        %v1494 = vpop.f32.mrb[0].mxu0
        %v1495 = vadd.f32 %v341, %v1494
        %v1496 = vpop.f32.mrb[0].mxu0
        %v1497 = vpop.f32.mrb[0].mxu0
        %v1498 = vpop.f32.mrb[0].mxu0
        %1499 = vdwg.mxu0
        %v1500 = vadd.f32 %v302, %v1495
        %v1501 = vsel %vm375, %v1500, 0.0
        %1502 = vadd.xlane.f32.xlu0 %v1501
        %v1503 = vpop.xlane.xlu0 %1502
        %v1504 = vrcp.pop 32.0
        %v1505 = vmul.f32 %v1503, %v1504
        %v1506 = vsub.f32 %v1500, %v1505
        %v1507 = vmul.f32 %v1506, %v1506
        %v1508 = vsel %vm375, %v1507, 0.0
        %1509 = vadd.xlane.f32.xlu0 %v1508
        %v1510 = vpop.xlane.xlu0 %1509
        %v1511 = vmul.f32 %v1510, %v1504
        %v1512 = vadd.f32 %v1511, 1e-05
        %v1513 = vrsqrt.pop %v1512
        %v1514 = vmul.f32 %v1506, %v1513
        %v1515 = vmul.f32 %v1514, %v349
        %v1516 = vadd.f32 %v1515, %v353
        %v1517 = vpack.c.bf16 %v1516, %v1516
        %v1522 = vunpack.c.l.b16 %v311
        %v1523 = vunpack.c.l.b16 %v312
        %v1524 = vunpack.c.l.b16 %v313
        %v1525 = vunpack.c.l.b16 %v314
        %v1526 = vpack.c.b16 %v1523, %v1522
        %v1527 = vpack.c.b16 %v1525, %v1524
        %v1531 = vsel %vm375, %v1517, 0
        %1533 = vmatprep.subr.bf16.mxu0 0
        %1534 = vmatpush1.bf16.msra.mxu0 %v1526
        %1535 = vmatprep.subr.bf16.mxu0 0
        %1536 = vmatpush1.bf16.msra.mxu0 %v1527
        %1537 = vmatprep.subr.bf16.mxu0 0
        %1538 = vmatpush1.bf16.msra.mxu0 0
        %1539 = vmatprep.subr.bf16.mxu0 0
        %1540 = vmatpush1.bf16.msra.mxu0 0
        %1541 = vmatprep.subr.bf16.mxu0 0
        %1542 = vmatpush1.bf16.msra.mxu0 0
        %1543 = vmatprep.subr.bf16.mxu0 0
        %1544 = vmatpush1.bf16.msra.mxu0 0
        %1545 = vmatprep.subr.bf16.mxu0 0
        %1546 = vmatpush1.bf16.msra.mxu0 0
        %1547 = vmatprep.subr.bf16.mxu0 0
        %1548 = vmatpush1.bf16.msra.mxu0 0
        %1549 = vmatprep.subr.bf16.mxu0 0
        %1550 = vmatpush1.bf16.msra.mxu0 0
        %1551 = vmatprep.subr.bf16.mxu0 0
        %1552 = vmatpush1.bf16.msra.mxu0 0
        %1553 = vmatprep.subr.bf16.mxu0 0
        %1554 = vmatpush1.bf16.msra.mxu0 0
        %1555 = vmatprep.subr.bf16.mxu0 0
        %1556 = vmatpush1.bf16.msra.mxu0 0
        %1557 = vmatprep.subr.bf16.mxu0 0
        %1558 = vmatpush1.bf16.msra.mxu0 0
        %1559 = vmatprep.subr.bf16.mxu0 0
        %1560 = vmatpush1.bf16.msra.mxu0 0
        %1561 = vmatprep.subr.bf16.mxu0 0
        %1562 = vmatpush1.bf16.msra.mxu0 0
        %1563 = vmatprep.subr.bf16.mxu0 0
        %1564 = vmatpush1.bf16.msra.mxu0 0
        %1565 = vmatprep.mubr.bf16.mxu0 0
        %1566 = vmatmul.mubr.bf16.gmra.mrb[0].mxu0 %v1531
        %v1567 = vpop.f32.mrb[0].mxu0
        %v1568 = vadd.f32 %v335, %v1567
        %v1569 = vpop.f32.mrb[0].mxu0
        %v1570 = vpop.f32.mrb[0].mxu0
        %v1571 = vpop.f32.mrb[0].mxu0
        %1572 = vdwg.mxu0
        %v1573 = vmax.f32 %v1568, 0.0
        %v1574 = vpack.c.bf16 %v1573, %v1573
        %v1583 = vunpack.c.l.b16 %v315
        %v1584 = vunpack.c.l.b16 %v316
        %v1585 = vunpack.c.l.b16 %v317
        %v1586 = vunpack.c.l.b16 %v318
        %v1587 = vunpack.c.l.b16 %v319
        %v1588 = vunpack.c.l.b16 %v320
        %v1589 = vunpack.c.l.b16 %v321
        %v1590 = vunpack.c.l.b16 %v322
        %v1591 = vpack.c.b16 %v1584, %v1583
        %v1592 = vpack.c.b16 %v1586, %v1585
        %v1593 = vpack.c.b16 %v1588, %v1587
        %v1594 = vpack.c.b16 %v1590, %v1589
        %vm1599 = vcmask 523264
        %v1601 = vsel %vm1599, %v1574, 0
        %1603 = vmatprep.subr.bf16.mxu0 0
        %1604 = vmatpush1.bf16.msra.mxu0 %v1591
        %1605 = vmatprep.subr.bf16.mxu0 0
        %1606 = vmatpush1.bf16.msra.mxu0 %v1592
        %1607 = vmatprep.subr.bf16.mxu0 0
        %1608 = vmatpush1.bf16.msra.mxu0 %v1593
        %1609 = vmatprep.subr.bf16.mxu0 0
        %1610 = vmatpush1.bf16.msra.mxu0 %v1594
        %1611 = vmatprep.subr.bf16.mxu0 0
        %1612 = vmatpush1.bf16.msra.mxu0 0
        %1613 = vmatprep.subr.bf16.mxu0 0
        %1614 = vmatpush1.bf16.msra.mxu0 0
        %1615 = vmatprep.subr.bf16.mxu0 0
        %1616 = vmatpush1.bf16.msra.mxu0 0
        %1617 = vmatprep.subr.bf16.mxu0 0
        %1618 = vmatpush1.bf16.msra.mxu0 0
        %1619 = vmatprep.subr.bf16.mxu0 0
        %1620 = vmatpush1.bf16.msra.mxu0 0
        %1621 = vmatprep.subr.bf16.mxu0 0
        %1622 = vmatpush1.bf16.msra.mxu0 0
        %1623 = vmatprep.subr.bf16.mxu0 0
        %1624 = vmatpush1.bf16.msra.mxu0 0
        %1625 = vmatprep.subr.bf16.mxu0 0
        %1626 = vmatpush1.bf16.msra.mxu0 0
        %1627 = vmatprep.subr.bf16.mxu0 0
        %1628 = vmatpush1.bf16.msra.mxu0 0
        %1629 = vmatprep.subr.bf16.mxu0 0
        %1630 = vmatpush1.bf16.msra.mxu0 0
        %1631 = vmatprep.subr.bf16.mxu0 0
        %1632 = vmatpush1.bf16.msra.mxu0 0
        %1633 = vmatprep.subr.bf16.mxu0 0
        %1634 = vmatpush1.bf16.msra.mxu0 0
        %1635 = vmatprep.mubr.bf16.mxu0 0
        %1636 = vmatmul.mubr.bf16.gmra.mrb[0].mxu0 %v1601
        %v1637 = vpop.f32.mrb[0].mxu0
        %v1638 = vadd.f32 %v345, %v1637
        %v1639 = vpop.f32.mrb[0].mxu0
        %v1640 = vpop.f32.mrb[0].mxu0
        %v1641 = vpop.f32.mrb[0].mxu0
        %1642 = vdwg.mxu0
        %v1643 = vadd.f32 %v1516, %v1638
        %v1644 = vsel %vm375, %v1643, 0.0
        %1645 = vadd.xlane.f32.xlu0 %v1644
        %v1646 = vpop.xlane.xlu0 %1645
        %v1647 = vmul.f32 %v1646, %v1504
        %v1648 = vsub.f32 %v1643, %v1647
        %v1649 = vmul.f32 %v1648, %v1648
        %v1650 = vsel %vm375, %v1649, 0.0
        %1651 = vadd.xlane.f32.xlu0 %v1650
        %v1652 = vpop.xlane.xlu0 %1651
        %v1653 = vmul.f32 %v1652, %v1504
        %v1654 = vadd.f32 %v1653, 1e-05
        %v1655 = vrsqrt.pop %v1654
        %v1656 = vmul.f32 %v1648, %v1655
        %v1657 = vmul.f32 %v1656, %v357
        %v1658 = vadd.f32 %v1657, %v361
        %v1659 = vpack.c.bf16 %v1658, %v1658
        %v1661 = vsel %vm375, %v1659, 0
        %1663 = vmatprep.subr.bf16.mxu0 0
        %1664 = vmatpush1.bf16.msra.mxu0 %v371
        %1665 = vmatprep.subr.bf16.mxu0 0
        %1666 = vmatpush1.bf16.msra.mxu0 %v372
        %1667 = vmatprep.subr.bf16.mxu0 0
        %1668 = vmatpush1.bf16.msra.mxu0 0
        %1669 = vmatprep.subr.bf16.mxu0 0
        %1670 = vmatpush1.bf16.msra.mxu0 0
        %1671 = vmatprep.subr.bf16.mxu0 0
        %1672 = vmatpush1.bf16.msra.mxu0 0
        %1673 = vmatprep.subr.bf16.mxu0 0
        %1674 = vmatpush1.bf16.msra.mxu0 0
        %1675 = vmatprep.subr.bf16.mxu0 0
        %1676 = vmatpush1.bf16.msra.mxu0 0
        %1677 = vmatprep.subr.bf16.mxu0 0
        %1678 = vmatpush1.bf16.msra.mxu0 0
        %1679 = vmatprep.subr.bf16.mxu0 0
        %1680 = vmatpush1.bf16.msra.mxu0 0
        %1681 = vmatprep.subr.bf16.mxu0 0
        %1682 = vmatpush1.bf16.msra.mxu0 0
        %1683 = vmatprep.subr.bf16.mxu0 0
        %1684 = vmatpush1.bf16.msra.mxu0 0
        %1685 = vmatprep.subr.bf16.mxu0 0
        %1686 = vmatpush1.bf16.msra.mxu0 0
        %1687 = vmatprep.subr.bf16.mxu0 0
        %1688 = vmatpush1.bf16.msra.mxu0 0
        %1689 = vmatprep.subr.bf16.mxu0 0
        %1690 = vmatpush1.bf16.msra.mxu0 0
        %1691 = vmatprep.subr.bf16.mxu0 0
        %1692 = vmatpush1.bf16.msra.mxu0 0
        %1693 = vmatprep.subr.bf16.mxu0 0
        %1694 = vmatpush1.bf16.msra.mxu0 0
        %1695 = vmatprep.mubr.bf16.mxu0 0
        %1696 = vmatmul.mubr.bf16.gmra.mrb[0].mxu0 %v1661
        %v1697 = vpop.f32.mrb[0].mxu0
        %v1698 = vadd.f32 %v328, %v1697
        %v1699 = vpop.f32.mrb[0].mxu0
        %v1700 = vpop.f32.mrb[0].mxu0
        %v1701 = vpop.f32.mrb[0].mxu0
        %1702 = vdwg.mxu0
        %1704 = vrot.lane.b32.xlu0 %v1698, 120
        %v1705 = vpop.permute.xlu0 %1704
        %1707 = vrot.lane.b32.xlu0 %v1698, 112
        %v1708 = vpop.permute.xlu0 %1707
        %1710 = vrot.lane.b32.xlu0 %v1698, 104
        %v1711 = vpop.permute.xlu0 %1710
        %1713 = vrot.lane.b32.xlu0 %v1698, 96
        %v1714 = vpop.permute.xlu0 %1713
        %1716 = vrot.lane.b32.xlu0 %v1698, 88
        %v1717 = vpop.permute.xlu0 %1716
        %1719 = vrot.lane.b32.xlu0 %v1698, 80
        %v1720 = vpop.permute.xlu0 %1719
        %1722 = vrot.lane.b32.xlu0 %v1698, 72
        %v1723 = vpop.permute.xlu0 %1722
        %1725 = vrot.lane.b32.xlu0 %v1698, 64
        %v1726 = vpop.permute.xlu0 %1725
        %1728 = vrot.lane.b32.xlu0 %v1698, 56
        %v1729 = vpop.permute.xlu0 %1728
        %1731 = vrot.lane.b32.xlu0 %v1698, 48
        %v1732 = vpop.permute.xlu0 %1731
        %1734 = vrot.lane.b32.xlu0 %v1698, 40
        %v1735 = vpop.permute.xlu0 %1734
        %v1737 = vcombine.low %v1698, %v1708
        %v1738 = vcombine.high %v1698, %v1708
        %v1740 = vunpack.c.l.s4 1983009808
        %v1741 = vunpack.c.0.s8 %v1740
        %v1742 = vlaneseq
        %v1743 = vshrl.u32 %v1742, 7
        %v1744 = vsub.s32 %v1741, %v1743
        %v1745 = vrot.slane %v1737, %v1744
        %v1747 = vunpack.c.l.s4 1983009808
        %v1748 = vunpack.c.0.s8 %v1747
        %v1749 = vlaneseq
        %v1750 = vshrl.u32 %v1749, 7
        %v1751 = vsub.s32 %v1748, %v1750
        %v1752 = vrot.slane %v1738, %v1751
        %v1753 = vcombine.low %v1705, %v1711
        %v1754 = vcombine.high %v1705, %v1711
        %v1756 = vunpack.c.l.s4 1983009808
        %v1757 = vunpack.c.0.s8 %v1756
        %v1758 = vlaneseq
        %v1759 = vshrl.u32 %v1758, 7
        %v1760 = vsub.s32 %v1757, %v1759
        %v1761 = vrot.slane %v1753, %v1760
        %v1763 = vunpack.c.l.s4 1983009808
        %v1764 = vunpack.c.0.s8 %v1763
        %v1765 = vlaneseq
        %v1766 = vshrl.u32 %v1765, 7
        %v1767 = vsub.s32 %v1764, %v1766
        %v1768 = vrot.slane %v1754, %v1767
        %v1769 = vcombine.low %v1714, %v1720
        %v1770 = vcombine.high %v1714, %v1720
        %v1772 = vunpack.c.l.s4 1983009808
        %v1773 = vunpack.c.0.s8 %v1772
        %v1774 = vlaneseq
        %v1775 = vshrl.u32 %v1774, 7
        %v1776 = vsub.s32 %v1773, %v1775
        %v1777 = vrot.slane %v1769, %v1776
        %v1779 = vunpack.c.l.s4 1983009808
        %v1780 = vunpack.c.0.s8 %v1779
        %v1781 = vlaneseq
        %v1782 = vshrl.u32 %v1781, 7
        %v1783 = vsub.s32 %v1780, %v1782
        %v1784 = vrot.slane %v1770, %v1783
        %v1785 = vcombine.low %v1717, %v1723
        %v1786 = vcombine.high %v1717, %v1723
        %v1788 = vunpack.c.l.s4 1983009808
        %v1789 = vunpack.c.0.s8 %v1788
        %v1790 = vlaneseq
        %v1791 = vshrl.u32 %v1790, 7
        %v1792 = vsub.s32 %v1789, %v1791
        %v1793 = vrot.slane %v1785, %v1792
        %v1795 = vunpack.c.l.s4 1983009808
        %v1796 = vunpack.c.0.s8 %v1795
        %v1797 = vlaneseq
        %v1798 = vshrl.u32 %v1797, 7
        %v1799 = vsub.s32 %v1796, %v1798
        %v1800 = vrot.slane %v1786, %v1799
        %v1801 = vcombine.low %v1745, %v1761
        %v1802 = vcombine.high %v1745, %v1761
        %v1804 = vunpack.c.l.s4 1934713408
        %v1805 = vunpack.c.0.s8 %v1804
        %v1806 = vlaneseq
        %v1807 = vshrl.u32 %v1806, 7
        %v1808 = vsub.s32 %v1805, %v1807
        %v1809 = vrot.slane %v1801, %v1808
        %v1811 = vunpack.c.l.s4 1934713408
        %v1812 = vunpack.c.0.s8 %v1811
        %v1813 = vlaneseq
        %v1814 = vshrl.u32 %v1813, 7
        %v1815 = vsub.s32 %v1812, %v1814
        %v1816 = vrot.slane %v1802, %v1815
        %v1817 = vcombine.low %v1752, %v1768
        %v1818 = vcombine.high %v1752, %v1768
        %v1820 = vunpack.c.l.s4 1934713408
        %v1821 = vunpack.c.0.s8 %v1820
        %v1822 = vlaneseq
        %v1823 = vshrl.u32 %v1822, 7
        %v1824 = vsub.s32 %v1821, %v1823
        %v1825 = vrot.slane %v1817, %v1824
        %v1827 = vunpack.c.l.s4 1934713408
        %v1828 = vunpack.c.0.s8 %v1827
        %v1829 = vlaneseq
        %v1830 = vshrl.u32 %v1829, 7
        %v1831 = vsub.s32 %v1828, %v1830
        %v1832 = vrot.slane %v1818, %v1831
        %v1833 = vcombine.low %v1777, %v1793
        %v1834 = vcombine.high %v1777, %v1793
        %v1836 = vunpack.c.l.s4 1934713408
        %v1837 = vunpack.c.0.s8 %v1836
        %v1838 = vlaneseq
        %v1839 = vshrl.u32 %v1838, 7
        %v1840 = vsub.s32 %v1837, %v1839
        %v1841 = vrot.slane %v1833, %v1840
        %v1843 = vunpack.c.l.s4 1934713408
        %v1844 = vunpack.c.0.s8 %v1843
        %v1845 = vlaneseq
        %v1846 = vshrl.u32 %v1845, 7
        %v1847 = vsub.s32 %v1844, %v1846
        %v1848 = vrot.slane %v1834, %v1847
        %v1849 = vcombine.low %v1784, %v1800
        %v1850 = vcombine.high %v1784, %v1800
        %v1852 = vunpack.c.l.s4 1934713408
        %v1853 = vunpack.c.0.s8 %v1852
        %v1854 = vlaneseq
        %v1855 = vshrl.u32 %v1854, 7
        %v1856 = vsub.s32 %v1853, %v1855
        %v1857 = vrot.slane %v1849, %v1856
        %v1859 = vunpack.c.l.s4 1934713408
        %v1860 = vunpack.c.0.s8 %v1859
        %v1861 = vlaneseq
        %v1862 = vshrl.u32 %v1861, 7
        %v1863 = vsub.s32 %v1860, %v1862
        %v1864 = vrot.slane %v1850, %v1863
        %v1865 = vcombine.low %v1809, %v1841
        %v1866 = vcombine.high %v1809, %v1841
        %v1867 = vcombine.low %v1816, %v1848
        %v1868 = vcombine.high %v1816, %v1848
        %v1869 = vcombine.low %v1825, %v1857
        %v1870 = vcombine.high %v1825, %v1857
        %v1871 = vcombine.low %v1832, %v1864
        %v1872 = vcombine.high %v1832, %v1864
        %v1873 = vcombine.low %v1726, %v1732
        %v1874 = vcombine.high %v1726, %v1732
        %v1876 = vunpack.c.l.s4 1983009808
        %v1877 = vunpack.c.0.s8 %v1876
        %v1878 = vlaneseq
        %v1879 = vshrl.u32 %v1878, 7
        %v1880 = vsub.s32 %v1877, %v1879
        %v1881 = vrot.slane %v1873, %v1880
        %v1883 = vunpack.c.l.s4 1983009808
        %v1884 = vunpack.c.0.s8 %v1883
        %v1885 = vlaneseq
        %v1886 = vshrl.u32 %v1885, 7
        %v1887 = vsub.s32 %v1884, %v1886
        %v1888 = vrot.slane %v1874, %v1887
        %v1889 = vcombine.low %v1729, %v1735
        %v1890 = vcombine.high %v1729, %v1735
        %v1892 = vunpack.c.l.s4 1983009808
        %v1893 = vunpack.c.0.s8 %v1892
        %v1894 = vlaneseq
        %v1895 = vshrl.u32 %v1894, 7
        %v1896 = vsub.s32 %v1893, %v1895
        %v1897 = vrot.slane %v1889, %v1896
        %v1899 = vunpack.c.l.s4 1983009808
        %v1900 = vunpack.c.0.s8 %v1899
        %v1901 = vlaneseq
        %v1902 = vshrl.u32 %v1901, 7
        %v1903 = vsub.s32 %v1900, %v1902
        %v1904 = vrot.slane %v1890, %v1903
        %v1905 = vcombine.low %v1881, %v1897
        %v1906 = vcombine.high %v1881, %v1897
        %v1908 = vunpack.c.l.s4 1934713408
        %v1909 = vunpack.c.0.s8 %v1908
        %v1910 = vlaneseq
        %v1911 = vshrl.u32 %v1910, 7
        %v1912 = vsub.s32 %v1909, %v1911
        %v1913 = vrot.slane %v1905, %v1912
        %v1915 = vunpack.c.l.s4 1934713408
        %v1916 = vunpack.c.0.s8 %v1915
        %v1917 = vlaneseq
        %v1918 = vshrl.u32 %v1917, 7
        %v1919 = vsub.s32 %v1916, %v1918
        %v1920 = vrot.slane %v1906, %v1919
        %v1921 = vcombine.low %v1888, %v1904
        %v1922 = vcombine.high %v1888, %v1904
        %v1924 = vunpack.c.l.s4 1934713408
        %v1925 = vunpack.c.0.s8 %v1924
        %v1926 = vlaneseq
        %v1927 = vshrl.u32 %v1926, 7
        %v1928 = vsub.s32 %v1925, %v1927
        %v1929 = vrot.slane %v1921, %v1928
        %v1931 = vunpack.c.l.s4 1934713408
        %v1932 = vunpack.c.0.s8 %v1931
        %v1933 = vlaneseq
        %v1934 = vshrl.u32 %v1933, 7
        %v1935 = vsub.s32 %v1932, %v1934
        %v1936 = vrot.slane %v1922, %v1935
        %v1937 = vcombine.high %v1913, 0.0
        %v1938 = vcombine.high %v1920, 0.0
        %v1939 = vcombine.high %v1929, 0.0
        %v1940 = vcombine.high %v1936, 0.0
        %v1941 = vcombine.low %v1865, %v1867
        %v1942 = vcombine.high %v1865, %v1867
        %v1944 = vunpack.c.l.s4 1983009808
        %v1945 = vunpack.c.0.s8 %v1944
        %v1946 = vlaneseq
        %v1947 = vshrl.u32 %v1946, 7
        %v1948 = vsub.s32 %v1945, %v1947
        %v1949 = vrot.slane %v1941, %v1948
        %v1951 = vunpack.c.l.s4 1983009808
        %v1952 = vunpack.c.0.s8 %v1951
        %v1953 = vlaneseq
        %v1954 = vshrl.u32 %v1953, 7
        %v1955 = vsub.s32 %v1952, %v1954
        %v1956 = vrot.slane %v1942, %v1955
        %v1957 = vcombine.low %v1866, %v1868
        %v1958 = vcombine.high %v1866, %v1868
        %v1960 = vunpack.c.l.s4 1983009808
        %v1961 = vunpack.c.0.s8 %v1960
        %v1962 = vlaneseq
        %v1963 = vshrl.u32 %v1962, 7
        %v1964 = vsub.s32 %v1961, %v1963
        %v1965 = vrot.slane %v1957, %v1964
        %v1967 = vunpack.c.l.s4 1983009808
        %v1968 = vunpack.c.0.s8 %v1967
        %v1969 = vlaneseq
        %v1970 = vshrl.u32 %v1969, 7
        %v1971 = vsub.s32 %v1968, %v1970
        %v1972 = vrot.slane %v1958, %v1971
        %v1973 = vcombine.low %v1869, %v1871
        %v1974 = vcombine.high %v1869, %v1871
        %v1976 = vunpack.c.l.s4 1983009808
        %v1977 = vunpack.c.0.s8 %v1976
        %v1978 = vlaneseq
        %v1979 = vshrl.u32 %v1978, 7
        %v1980 = vsub.s32 %v1977, %v1979
        %v1981 = vrot.slane %v1973, %v1980
        %v1983 = vunpack.c.l.s4 1983009808
        %v1984 = vunpack.c.0.s8 %v1983
        %v1985 = vlaneseq
        %v1986 = vshrl.u32 %v1985, 7
        %v1987 = vsub.s32 %v1984, %v1986
        %v1988 = vrot.slane %v1974, %v1987
        %v1989 = vcombine.low %v1870, %v1872
        %v1990 = vcombine.high %v1870, %v1872
        %v1992 = vunpack.c.l.s4 1983009808
        %v1993 = vunpack.c.0.s8 %v1992
        %v1994 = vlaneseq
        %v1995 = vshrl.u32 %v1994, 7
        %v1996 = vsub.s32 %v1993, %v1995
        %v1997 = vrot.slane %v1989, %v1996
        %v1999 = vunpack.c.l.s4 1983009808
        %v2000 = vunpack.c.0.s8 %v1999
        %v2001 = vlaneseq
        %v2002 = vshrl.u32 %v2001, 7
        %v2003 = vsub.s32 %v2000, %v2002
        %v2004 = vrot.slane %v1990, %v2003
        %v2005 = vcombine.low %v1949, %v1965
        %v2006 = vcombine.high %v1949, %v1965
        %v2008 = vunpack.c.l.s4 1934713408
        %v2009 = vunpack.c.0.s8 %v2008
        %v2010 = vlaneseq
        %v2011 = vshrl.u32 %v2010, 7
        %v2012 = vsub.s32 %v2009, %v2011
        %v2013 = vrot.slane %v2005, %v2012
        %v2015 = vunpack.c.l.s4 1934713408
        %v2016 = vunpack.c.0.s8 %v2015
        %v2017 = vlaneseq
        %v2018 = vshrl.u32 %v2017, 7
        %v2019 = vsub.s32 %v2016, %v2018
        %v2020 = vrot.slane %v2006, %v2019
        %v2021 = vcombine.low %v1956, %v1972
        %v2022 = vcombine.high %v1956, %v1972
        %v2024 = vunpack.c.l.s4 1934713408
        %v2025 = vunpack.c.0.s8 %v2024
        %v2026 = vlaneseq
        %v2027 = vshrl.u32 %v2026, 7
        %v2028 = vsub.s32 %v2025, %v2027
        %v2029 = vrot.slane %v2021, %v2028
        %v2031 = vunpack.c.l.s4 1934713408
        %v2032 = vunpack.c.0.s8 %v2031
        %v2033 = vlaneseq
        %v2034 = vshrl.u32 %v2033, 7
        %v2035 = vsub.s32 %v2032, %v2034
        %v2036 = vrot.slane %v2022, %v2035
        %v2037 = vcombine.low %v1981, %v1997
        %v2038 = vcombine.high %v1981, %v1997
        %v2040 = vunpack.c.l.s4 1934713408
        %v2041 = vunpack.c.0.s8 %v2040
        %v2042 = vlaneseq
        %v2043 = vshrl.u32 %v2042, 7
        %v2044 = vsub.s32 %v2041, %v2043
        %v2045 = vrot.slane %v2037, %v2044
        %v2047 = vunpack.c.l.s4 1934713408
        %v2048 = vunpack.c.0.s8 %v2047
        %v2049 = vlaneseq
        %v2050 = vshrl.u32 %v2049, 7
        %v2051 = vsub.s32 %v2048, %v2050
        %v2052 = vrot.slane %v2038, %v2051
        %v2053 = vcombine.low %v1988, %v2004
        %v2054 = vcombine.high %v1988, %v2004
        %v2056 = vunpack.c.l.s4 1934713408
        %v2057 = vunpack.c.0.s8 %v2056
        %v2058 = vlaneseq
        %v2059 = vshrl.u32 %v2058, 7
        %v2060 = vsub.s32 %v2057, %v2059
        %v2061 = vrot.slane %v2053, %v2060
        %v2063 = vunpack.c.l.s4 1934713408
        %v2064 = vunpack.c.0.s8 %v2063
        %v2065 = vlaneseq
        %v2066 = vshrl.u32 %v2065, 7
        %v2067 = vsub.s32 %v2064, %v2066
        %v2068 = vrot.slane %v2054, %v2067
        %v2069 = vcombine.low %v2013, %v2045
        %v2070 = vcombine.high %v2013, %v2045
        %v2071 = vcombine.low %v2020, %v2052
        %v2072 = vcombine.high %v2020, %v2052
        %v2073 = vcombine.low %v2029, %v2061
        %v2074 = vcombine.high %v2029, %v2061
        %v2075 = vcombine.low %v2036, %v2068
        %v2076 = vcombine.high %v2036, %v2068
        %v2077 = vcombine.low %v1913, %v1920
        %v2079 = vunpack.c.l.s4 1983009808
        %v2080 = vunpack.c.0.s8 %v2079
        %v2081 = vlaneseq
        %v2082 = vshrl.u32 %v2081, 7
        %v2083 = vsub.s32 %v2080, %v2082
        %v2084 = vrot.slane %v2077, %v2083
        %v2085 = vcombine.low %v1937, %v1938
        %v2087 = vunpack.c.l.s4 1983009808
        %v2088 = vunpack.c.0.s8 %v2087
        %v2089 = vlaneseq
        %v2090 = vshrl.u32 %v2089, 7
        %v2091 = vsub.s32 %v2088, %v2090
        %v2092 = vrot.slane %v2085, %v2091
        %v2093 = vcombine.low %v1929, %v1936
        %v2095 = vunpack.c.l.s4 1983009808
        %v2096 = vunpack.c.0.s8 %v2095
        %v2097 = vlaneseq
        %v2098 = vshrl.u32 %v2097, 7
        %v2099 = vsub.s32 %v2096, %v2098
        %v2100 = vrot.slane %v2093, %v2099
        %v2101 = vcombine.low %v1939, %v1940
        %v2103 = vunpack.c.l.s4 1983009808
        %v2104 = vunpack.c.0.s8 %v2103
        %v2105 = vlaneseq
        %v2106 = vshrl.u32 %v2105, 7
        %v2107 = vsub.s32 %v2104, %v2106
        %v2108 = vrot.slane %v2101, %v2107
        %v2109 = vcombine.low %v2084, %v2092
        %v2110 = vcombine.high %v2084, %v2092
        %v2112 = vunpack.c.l.s4 1934713408
        %v2113 = vunpack.c.0.s8 %v2112
        %v2114 = vlaneseq
        %v2115 = vshrl.u32 %v2114, 7
        %v2116 = vsub.s32 %v2113, %v2115
        %v2117 = vrot.slane %v2109, %v2116
        %v2119 = vunpack.c.l.s4 1934713408
        %v2120 = vunpack.c.0.s8 %v2119
        %v2121 = vlaneseq
        %v2122 = vshrl.u32 %v2121, 7
        %v2123 = vsub.s32 %v2120, %v2122
        %v2124 = vrot.slane %v2110, %v2123
        %v2125 = vcombine.low %v2100, %v2108
        %v2126 = vcombine.high %v2100, %v2108
        %v2128 = vunpack.c.l.s4 1934713408
        %v2129 = vunpack.c.0.s8 %v2128
        %v2130 = vlaneseq
        %v2131 = vshrl.u32 %v2130, 7
        %v2132 = vsub.s32 %v2129, %v2131
        %v2133 = vrot.slane %v2125, %v2132
        %v2135 = vunpack.c.l.s4 1934713408
        %v2136 = vunpack.c.0.s8 %v2135
        %v2137 = vlaneseq
        %v2138 = vshrl.u32 %v2137, 7
        %v2139 = vsub.s32 %v2136, %v2138
        %v2140 = vrot.slane %v2126, %v2139
        %v2141 = vcombine.low %v2117, %v2133
        %v2142 = vcombine.high %v2117, %v2133
        %v2143 = vcombine.low %v2124, %v2140
        %v2144 = vcombine.high %v2124, %v2140
        %v2145 = vpack.c.bf16 %v2069, %v2069
        %v2146 = vpack.c.bf16 %v2070, %v2070
        %v2147 = vpack.c.bf16 %v2071, %v2071
        %v2148 = vpack.c.bf16 %v2072, %v2072
        %v2149 = vpack.c.bf16 %v2073, %v2073
        %v2150 = vpack.c.bf16 %v2074, %v2074
        %v2151 = vpack.c.bf16 %v2075, %v2075
        %v2152 = vpack.c.bf16 %v2076, %v2076
        %v2153 = vpack.c.bf16 %v2141, %v2141
        %v2154 = vpack.c.bf16 %v2142, %v2142
        %v2155 = vpack.c.bf16 %v2143, %v2143
        %v2156 = vpack.c.bf16 %v2144, %v2144
        %v2158 = vsel %vm873, %v2145, 0
        %v2161 = vsel %vm873, %v2149, 0
        %2163 = vmatprep.subr.bf16.mxu0 0
        %2164 = vmatpush1.bf16.xpose.msra.mxu0 %v2161
        %2165 = vmatprep.subr.bf16.mxu0 0
        %2166 = vmatpush1.bf16.xpose.msra.mxu0 0
        %2167 = vmatprep.subr.bf16.mxu0 0
        %2168 = vmatpush1.bf16.xpose.msra.mxu0 0
        %2169 = vmatprep.subr.bf16.mxu0 0
        %2170 = vmatpush1.bf16.xpose.msra.mxu0 0
        %2171 = vmatprep.subr.bf16.mxu0 0
        %2172 = vmatpush1.bf16.xpose.msra.mxu0 0
        %2173 = vmatprep.subr.bf16.mxu0 0
        %2174 = vmatpush1.bf16.xpose.msra.mxu0 0
        %2175 = vmatprep.subr.bf16.mxu0 0
        %2176 = vmatpush1.bf16.xpose.msra.mxu0 0
        %2177 = vmatprep.subr.bf16.mxu0 0
        %2178 = vmatpush1.bf16.xpose.msra.mxu0 0
        %2179 = vmatprep.subr.bf16.mxu0 0
        %2180 = vmatpush1.bf16.xpose.msra.mxu0 0
        %2181 = vmatprep.subr.bf16.mxu0 0
        %2182 = vmatpush1.bf16.xpose.msra.mxu0 0
        %2183 = vmatprep.subr.bf16.mxu0 0
        %2184 = vmatpush1.bf16.xpose.msra.mxu0 0
        %2185 = vmatprep.subr.bf16.mxu0 0
        %2186 = vmatpush1.bf16.xpose.msra.mxu0 0
        %2187 = vmatprep.subr.bf16.mxu0 0
        %2188 = vmatpush1.bf16.xpose.msra.mxu0 0
        %2189 = vmatprep.subr.bf16.mxu0 0
        %2190 = vmatpush1.bf16.xpose.msra.mxu0 0
        %2191 = vmatprep.subr.bf16.mxu0 0
        %2192 = vmatpush1.bf16.xpose.msra.mxu0 0
        %2193 = vmatprep.subr.bf16.mxu0 0
        %2194 = vmatpush1.bf16.xpose.msra.mxu0 0
        %2195 = vmatprep.mubr.bf16.mxu0 0
        %2196 = vmatmul.mubr.bf16.gmra.mrb[0].mxu0 %v2158
        %v2197 = vpop.f32.mrb[0].mxu0
        %v2198 = vadd.f32 0.0, %v2197
        %v2199 = vpop.f32.mrb[0].mxu0
        %v2200 = vpop.f32.mrb[0].mxu0
        %v2201 = vpop.f32.mrb[0].mxu0
        %2202 = vdwg.mxu0
        %v2204 = vsel %vm873, %v2146, 0
        %v2207 = vsel %vm873, %v2150, 0
        %2209 = vmatprep.subr.bf16.mxu0 0
        %2210 = vmatpush1.bf16.xpose.msra.mxu0 %v2207
        %2211 = vmatprep.subr.bf16.mxu0 0
        %2212 = vmatpush1.bf16.xpose.msra.mxu0 0
        %2213 = vmatprep.subr.bf16.mxu0 0
        %2214 = vmatpush1.bf16.xpose.msra.mxu0 0
        %2215 = vmatprep.subr.bf16.mxu0 0
        %2216 = vmatpush1.bf16.xpose.msra.mxu0 0
        %2217 = vmatprep.subr.bf16.mxu0 0
        %2218 = vmatpush1.bf16.xpose.msra.mxu0 0
        %2219 = vmatprep.subr.bf16.mxu0 0
        %2220 = vmatpush1.bf16.xpose.msra.mxu0 0
        %2221 = vmatprep.subr.bf16.mxu0 0
        %2222 = vmatpush1.bf16.xpose.msra.mxu0 0
        %2223 = vmatprep.subr.bf16.mxu0 0
        %2224 = vmatpush1.bf16.xpose.msra.mxu0 0
        %2225 = vmatprep.subr.bf16.mxu0 0
        %2226 = vmatpush1.bf16.xpose.msra.mxu0 0
        %2227 = vmatprep.subr.bf16.mxu0 0
        %2228 = vmatpush1.bf16.xpose.msra.mxu0 0
        %2229 = vmatprep.subr.bf16.mxu0 0
        %2230 = vmatpush1.bf16.xpose.msra.mxu0 0
        %2231 = vmatprep.subr.bf16.mxu0 0
        %2232 = vmatpush1.bf16.xpose.msra.mxu0 0
        %2233 = vmatprep.subr.bf16.mxu0 0
        %2234 = vmatpush1.bf16.xpose.msra.mxu0 0
        %2235 = vmatprep.subr.bf16.mxu0 0
        %2236 = vmatpush1.bf16.xpose.msra.mxu0 0
        %2237 = vmatprep.subr.bf16.mxu0 0
        %2238 = vmatpush1.bf16.xpose.msra.mxu0 0
        %2239 = vmatprep.subr.bf16.mxu0 0
        %2240 = vmatpush1.bf16.xpose.msra.mxu0 0
        %2241 = vmatprep.mubr.bf16.mxu0 0
        %2242 = vmatmul.mubr.bf16.gmra.mrb[0].mxu0 %v2204
        %v2243 = vpop.f32.mrb[0].mxu0
        %v2244 = vadd.f32 0.0, %v2243
        %v2245 = vpop.f32.mrb[0].mxu0
        %v2246 = vpop.f32.mrb[0].mxu0
        %v2247 = vpop.f32.mrb[0].mxu0
        %2248 = vdwg.mxu0
        %v2250 = vsel %vm873, %v2147, 0
        %v2253 = vsel %vm873, %v2151, 0
        %2255 = vmatprep.subr.bf16.mxu0 0
        %2256 = vmatpush1.bf16.xpose.msra.mxu0 %v2253
        %2257 = vmatprep.subr.bf16.mxu0 0
        %2258 = vmatpush1.bf16.xpose.msra.mxu0 0
        %2259 = vmatprep.subr.bf16.mxu0 0
        %2260 = vmatpush1.bf16.xpose.msra.mxu0 0
        %2261 = vmatprep.subr.bf16.mxu0 0
        %2262 = vmatpush1.bf16.xpose.msra.mxu0 0
        %2263 = vmatprep.subr.bf16.mxu0 0
        %2264 = vmatpush1.bf16.xpose.msra.mxu0 0
        %2265 = vmatprep.subr.bf16.mxu0 0
        %2266 = vmatpush1.bf16.xpose.msra.mxu0 0
        %2267 = vmatprep.subr.bf16.mxu0 0
        %2268 = vmatpush1.bf16.xpose.msra.mxu0 0
        %2269 = vmatprep.subr.bf16.mxu0 0
        %2270 = vmatpush1.bf16.xpose.msra.mxu0 0
        %2271 = vmatprep.subr.bf16.mxu0 0
        %2272 = vmatpush1.bf16.xpose.msra.mxu0 0
        %2273 = vmatprep.subr.bf16.mxu0 0
        %2274 = vmatpush1.bf16.xpose.msra.mxu0 0
        %2275 = vmatprep.subr.bf16.mxu0 0
        %2276 = vmatpush1.bf16.xpose.msra.mxu0 0
        %2277 = vmatprep.subr.bf16.mxu0 0
        %2278 = vmatpush1.bf16.xpose.msra.mxu0 0
        %2279 = vmatprep.subr.bf16.mxu0 0
        %2280 = vmatpush1.bf16.xpose.msra.mxu0 0
        %2281 = vmatprep.subr.bf16.mxu0 0
        %2282 = vmatpush1.bf16.xpose.msra.mxu0 0
        %2283 = vmatprep.subr.bf16.mxu0 0
        %2284 = vmatpush1.bf16.xpose.msra.mxu0 0
        %2285 = vmatprep.subr.bf16.mxu0 0
        %2286 = vmatpush1.bf16.xpose.msra.mxu0 0
        %2287 = vmatprep.mubr.bf16.mxu0 0
        %2288 = vmatmul.mubr.bf16.gmra.mrb[0].mxu0 %v2250
        %v2289 = vpop.f32.mrb[0].mxu0
        %v2290 = vadd.f32 0.0, %v2289
        %v2291 = vpop.f32.mrb[0].mxu0
        %v2292 = vpop.f32.mrb[0].mxu0
        %v2293 = vpop.f32.mrb[0].mxu0
        %2294 = vdwg.mxu0
        %v2296 = vsel %vm873, %v2148, 0
        %v2299 = vsel %vm873, %v2152, 0
        %2301 = vmatprep.subr.bf16.mxu0 0
        %2302 = vmatpush1.bf16.xpose.msra.mxu0 %v2299
        %2303 = vmatprep.subr.bf16.mxu0 0
        %2304 = vmatpush1.bf16.xpose.msra.mxu0 0
        %2305 = vmatprep.subr.bf16.mxu0 0
        %2306 = vmatpush1.bf16.xpose.msra.mxu0 0
        %2307 = vmatprep.subr.bf16.mxu0 0
        %2308 = vmatpush1.bf16.xpose.msra.mxu0 0
        %2309 = vmatprep.subr.bf16.mxu0 0
        %2310 = vmatpush1.bf16.xpose.msra.mxu0 0
        %2311 = vmatprep.subr.bf16.mxu0 0
        %2312 = vmatpush1.bf16.xpose.msra.mxu0 0
        %2313 = vmatprep.subr.bf16.mxu0 0
        %2314 = vmatpush1.bf16.xpose.msra.mxu0 0
        %2315 = vmatprep.subr.bf16.mxu0 0
        %2316 = vmatpush1.bf16.xpose.msra.mxu0 0
        %2317 = vmatprep.subr.bf16.mxu0 0
        %2318 = vmatpush1.bf16.xpose.msra.mxu0 0
        %2319 = vmatprep.subr.bf16.mxu0 0
        %2320 = vmatpush1.bf16.xpose.msra.mxu0 0
        %2321 = vmatprep.subr.bf16.mxu0 0
        %2322 = vmatpush1.bf16.xpose.msra.mxu0 0
        %2323 = vmatprep.subr.bf16.mxu0 0
        %2324 = vmatpush1.bf16.xpose.msra.mxu0 0
        %2325 = vmatprep.subr.bf16.mxu0 0
        %2326 = vmatpush1.bf16.xpose.msra.mxu0 0
        %2327 = vmatprep.subr.bf16.mxu0 0
        %2328 = vmatpush1.bf16.xpose.msra.mxu0 0
        %2329 = vmatprep.subr.bf16.mxu0 0
        %2330 = vmatpush1.bf16.xpose.msra.mxu0 0
        %2331 = vmatprep.subr.bf16.mxu0 0
        %2332 = vmatpush1.bf16.xpose.msra.mxu0 0
        %2333 = vmatprep.mubr.bf16.mxu0 0
        %2334 = vmatmul.mubr.bf16.gmra.mrb[0].mxu0 %v2296
        %v2335 = vpop.f32.mrb[0].mxu0
        %v2336 = vadd.f32 0.0, %v2335
        %v2337 = vpop.f32.mrb[0].mxu0
        %v2338 = vpop.f32.mrb[0].mxu0
        %v2339 = vpop.f32.mrb[0].mxu0
        %2340 = vdwg.mxu0
        %v2341 = vsel %vm873, %v2198, -inf
        %2342 = vmax.xlane.f32.xlu0 %v2341
        %v2343 = vpop.xlane.xlu0 %2342
        %v2344 = vsel %vm873, %v2244, -inf
        %2345 = vmax.xlane.f32.xlu0 %v2344
        %v2346 = vpop.xlane.xlu0 %2345
        %v2347 = vsel %vm873, %v2290, -inf
        %2348 = vmax.xlane.f32.xlu0 %v2347
        %v2349 = vpop.xlane.xlu0 %2348
        %v2350 = vsel %vm873, %v2336, -inf
        %2351 = vmax.xlane.f32.xlu0 %v2350
        %v2352 = vpop.xlane.xlu0 %2351
        %v2353 = vsub.f32 %v2198, %v2343
        %v2354 = vsub.f32 %v2244, %v2346
        %v2355 = vsub.f32 %v2290, %v2349
        %v2356 = vsub.f32 %v2336, %v2352
        %v2357 = vmul.f32 %v2353, 1.442695
        %v2358 = vpow.pop %v2357
        %v2359 = vmul.f32 %v2354, 1.442695
        %v2360 = vpow.pop %v2359
        %v2361 = vmul.f32 %v2355, 1.442695
        %v2362 = vpow.pop %v2361
        %v2363 = vmul.f32 %v2356, 1.442695
        %v2364 = vpow.pop %v2363
        %v2365 = vsel %vm873, %v2358, 0.0
        %2366 = vadd.xlane.f32.xlu0 %v2365
        %v2367 = vpop.xlane.xlu0 %2366
        %v2368 = vsel %vm873, %v2360, 0.0
        %2369 = vadd.xlane.f32.xlu0 %v2368
        %v2370 = vpop.xlane.xlu0 %2369
        %v2371 = vsel %vm873, %v2362, 0.0
        %2372 = vadd.xlane.f32.xlu0 %v2371
        %v2373 = vpop.xlane.xlu0 %2372
        %v2374 = vsel %vm873, %v2364, 0.0
        %2375 = vadd.xlane.f32.xlu0 %v2374
        %v2376 = vpop.xlane.xlu0 %2375
        %v2377 = vrcp.pop %v2367
        %v2378 = vrcp.pop %v2370
        %v2379 = vrcp.pop %v2373
        %v2380 = vrcp.pop %v2376
        %v2381 = vmul.f32 %v2358, %v2377
        %v2382 = vmul.f32 %v2360, %v2378
        %v2383 = vmul.f32 %v2362, %v2379
        %v2384 = vmul.f32 %v2364, %v2380
        %v2385 = vpack.c.bf16 %v2381, %v2381
        %v2386 = vpack.c.bf16 %v2382, %v2382
        %v2387 = vpack.c.bf16 %v2383, %v2383
        %v2388 = vpack.c.bf16 %v2384, %v2384
        %v2390 = vsel %vm873, %v2385, 0
        %v2393 = vsel %vm1109, %v2153, 0
        %2395 = vmatprep.subr.bf16.mxu0 0
        %2396 = vmatpush1.bf16.msra.mxu0 %v2393
        %2397 = vmatprep.subr.bf16.mxu0 0
        %2398 = vmatpush1.bf16.msra.mxu0 0
        %2399 = vmatprep.subr.bf16.mxu0 0
        %2400 = vmatpush1.bf16.msra.mxu0 0
        %2401 = vmatprep.subr.bf16.mxu0 0
        %2402 = vmatpush1.bf16.msra.mxu0 0
        %2403 = vmatprep.subr.bf16.mxu0 0
        %2404 = vmatpush1.bf16.msra.mxu0 0
        %2405 = vmatprep.subr.bf16.mxu0 0
        %2406 = vmatpush1.bf16.msra.mxu0 0
        %2407 = vmatprep.subr.bf16.mxu0 0
        %2408 = vmatpush1.bf16.msra.mxu0 0
        %2409 = vmatprep.subr.bf16.mxu0 0
        %2410 = vmatpush1.bf16.msra.mxu0 0
        %2411 = vmatprep.subr.bf16.mxu0 0
        %2412 = vmatpush1.bf16.msra.mxu0 0
        %2413 = vmatprep.subr.bf16.mxu0 0
        %2414 = vmatpush1.bf16.msra.mxu0 0
        %2415 = vmatprep.subr.bf16.mxu0 0
        %2416 = vmatpush1.bf16.msra.mxu0 0
        %2417 = vmatprep.subr.bf16.mxu0 0
        %2418 = vmatpush1.bf16.msra.mxu0 0
        %2419 = vmatprep.subr.bf16.mxu0 0
        %2420 = vmatpush1.bf16.msra.mxu0 0
        %2421 = vmatprep.subr.bf16.mxu0 0
        %2422 = vmatpush1.bf16.msra.mxu0 0
        %2423 = vmatprep.subr.bf16.mxu0 0
        %2424 = vmatpush1.bf16.msra.mxu0 0
        %2425 = vmatprep.subr.bf16.mxu0 0
        %2426 = vmatpush1.bf16.msra.mxu0 0
        %2427 = vmatprep.mubr.bf16.mxu0 0
        %2428 = vmatmul.mubr.bf16.gmra.mrb[0].mxu0 %v2390
        %v2429 = vpop.f32.mrb[0].mxu0
        %v2430 = vadd.f32 0.0, %v2429
        %v2431 = vpop.f32.mrb[0].mxu0
        %v2432 = vpop.f32.mrb[0].mxu0
        %v2433 = vpop.f32.mrb[0].mxu0
        %2434 = vdwg.mxu0
        %v2436 = vsel %vm873, %v2386, 0
        %v2439 = vsel %vm1109, %v2154, 0
        %2441 = vmatprep.subr.bf16.mxu0 0
        %2442 = vmatpush1.bf16.msra.mxu0 %v2439
        %2443 = vmatprep.subr.bf16.mxu0 0
        %2444 = vmatpush1.bf16.msra.mxu0 0
        %2445 = vmatprep.subr.bf16.mxu0 0
        %2446 = vmatpush1.bf16.msra.mxu0 0
        %2447 = vmatprep.subr.bf16.mxu0 0
        %2448 = vmatpush1.bf16.msra.mxu0 0
        %2449 = vmatprep.subr.bf16.mxu0 0
        %2450 = vmatpush1.bf16.msra.mxu0 0
        %2451 = vmatprep.subr.bf16.mxu0 0
        %2452 = vmatpush1.bf16.msra.mxu0 0
        %2453 = vmatprep.subr.bf16.mxu0 0
        %2454 = vmatpush1.bf16.msra.mxu0 0
        %2455 = vmatprep.subr.bf16.mxu0 0
        %2456 = vmatpush1.bf16.msra.mxu0 0
        %2457 = vmatprep.subr.bf16.mxu0 0
        %2458 = vmatpush1.bf16.msra.mxu0 0
        %2459 = vmatprep.subr.bf16.mxu0 0
        %2460 = vmatpush1.bf16.msra.mxu0 0
        %2461 = vmatprep.subr.bf16.mxu0 0
        %2462 = vmatpush1.bf16.msra.mxu0 0
        %2463 = vmatprep.subr.bf16.mxu0 0
        %2464 = vmatpush1.bf16.msra.mxu0 0
        %2465 = vmatprep.subr.bf16.mxu0 0
        %2466 = vmatpush1.bf16.msra.mxu0 0
        %2467 = vmatprep.subr.bf16.mxu0 0
        %2468 = vmatpush1.bf16.msra.mxu0 0
        %2469 = vmatprep.subr.bf16.mxu0 0
        %2470 = vmatpush1.bf16.msra.mxu0 0
        %2471 = vmatprep.subr.bf16.mxu0 0
        %2472 = vmatpush1.bf16.msra.mxu0 0
        %2473 = vmatprep.mubr.bf16.mxu0 0
        %2474 = vmatmul.mubr.bf16.gmra.mrb[0].mxu0 %v2436
        %v2475 = vpop.f32.mrb[0].mxu0
        %v2476 = vadd.f32 0.0, %v2475
        %v2477 = vpop.f32.mrb[0].mxu0
        %v2478 = vpop.f32.mrb[0].mxu0
        %v2479 = vpop.f32.mrb[0].mxu0
        %2480 = vdwg.mxu0
        %v2482 = vsel %vm873, %v2387, 0
        %v2485 = vsel %vm1109, %v2155, 0
        %2487 = vmatprep.subr.bf16.mxu0 0
        %2488 = vmatpush1.bf16.msra.mxu0 %v2485
        %2489 = vmatprep.subr.bf16.mxu0 0
        %2490 = vmatpush1.bf16.msra.mxu0 0
        %2491 = vmatprep.subr.bf16.mxu0 0
        %2492 = vmatpush1.bf16.msra.mxu0 0
        %2493 = vmatprep.subr.bf16.mxu0 0
        %2494 = vmatpush1.bf16.msra.mxu0 0
        %2495 = vmatprep.subr.bf16.mxu0 0
        %2496 = vmatpush1.bf16.msra.mxu0 0
        %2497 = vmatprep.subr.bf16.mxu0 0
        %2498 = vmatpush1.bf16.msra.mxu0 0
        %2499 = vmatprep.subr.bf16.mxu0 0
        %2500 = vmatpush1.bf16.msra.mxu0 0
        %2501 = vmatprep.subr.bf16.mxu0 0
        %2502 = vmatpush1.bf16.msra.mxu0 0
        %2503 = vmatprep.subr.bf16.mxu0 0
        %2504 = vmatpush1.bf16.msra.mxu0 0
        %2505 = vmatprep.subr.bf16.mxu0 0
        %2506 = vmatpush1.bf16.msra.mxu0 0
        %2507 = vmatprep.subr.bf16.mxu0 0
        %2508 = vmatpush1.bf16.msra.mxu0 0
        %2509 = vmatprep.subr.bf16.mxu0 0
        %2510 = vmatpush1.bf16.msra.mxu0 0
        %2511 = vmatprep.subr.bf16.mxu0 0
        %2512 = vmatpush1.bf16.msra.mxu0 0
        %2513 = vmatprep.subr.bf16.mxu0 0
        %2514 = vmatpush1.bf16.msra.mxu0 0
        %2515 = vmatprep.subr.bf16.mxu0 0
        %2516 = vmatpush1.bf16.msra.mxu0 0
        %2517 = vmatprep.subr.bf16.mxu0 0
        %2518 = vmatpush1.bf16.msra.mxu0 0
        %2519 = vmatprep.mubr.bf16.mxu0 0
        %2520 = vmatmul.mubr.bf16.gmra.mrb[0].mxu0 %v2482
        %v2521 = vpop.f32.mrb[0].mxu0
        %v2522 = vadd.f32 0.0, %v2521
        %v2523 = vpop.f32.mrb[0].mxu0
        %v2524 = vpop.f32.mrb[0].mxu0
        %v2525 = vpop.f32.mrb[0].mxu0
        %2526 = vdwg.mxu0
        %v2528 = vsel %vm873, %v2388, 0
        %v2531 = vsel %vm1109, %v2156, 0
        %2533 = vmatprep.subr.bf16.mxu0 0
        %2534 = vmatpush1.bf16.msra.mxu0 %v2531
        %2535 = vmatprep.subr.bf16.mxu0 0
        %2536 = vmatpush1.bf16.msra.mxu0 0
        %2537 = vmatprep.subr.bf16.mxu0 0
        %2538 = vmatpush1.bf16.msra.mxu0 0
        %2539 = vmatprep.subr.bf16.mxu0 0
        %2540 = vmatpush1.bf16.msra.mxu0 0
        %2541 = vmatprep.subr.bf16.mxu0 0
        %2542 = vmatpush1.bf16.msra.mxu0 0
        %2543 = vmatprep.subr.bf16.mxu0 0
        %2544 = vmatpush1.bf16.msra.mxu0 0
        %2545 = vmatprep.subr.bf16.mxu0 0
        %2546 = vmatpush1.bf16.msra.mxu0 0
        %2547 = vmatprep.subr.bf16.mxu0 0
        %2548 = vmatpush1.bf16.msra.mxu0 0
        %2549 = vmatprep.subr.bf16.mxu0 0
        %2550 = vmatpush1.bf16.msra.mxu0 0
        %2551 = vmatprep.subr.bf16.mxu0 0
        %2552 = vmatpush1.bf16.msra.mxu0 0
        %2553 = vmatprep.subr.bf16.mxu0 0
        %2554 = vmatpush1.bf16.msra.mxu0 0
        %2555 = vmatprep.subr.bf16.mxu0 0
        %2556 = vmatpush1.bf16.msra.mxu0 0
        %2557 = vmatprep.subr.bf16.mxu0 0
        %2558 = vmatpush1.bf16.msra.mxu0 0
        %2559 = vmatprep.subr.bf16.mxu0 0
        %2560 = vmatpush1.bf16.msra.mxu0 0
        %2561 = vmatprep.subr.bf16.mxu0 0
        %2562 = vmatpush1.bf16.msra.mxu0 0
        %2563 = vmatprep.subr.bf16.mxu0 0
        %2564 = vmatpush1.bf16.msra.mxu0 0
        %2565 = vmatprep.mubr.bf16.mxu0 0
        %2566 = vmatmul.mubr.bf16.gmra.mrb[0].mxu0 %v2528
        %v2567 = vpop.f32.mrb[0].mxu0
        %v2568 = vadd.f32 0.0, %v2567
        %v2569 = vpop.f32.mrb[0].mxu0
        %v2570 = vpop.f32.mrb[0].mxu0
        %v2571 = vpop.f32.mrb[0].mxu0
        %2572 = vdwg.mxu0
        %v2573 = vcombine.low %v2430, %v2522
        %v2574 = vcombine.high %v2430, %v2522
        %v2576 = vunpack.c.l.s4 1983009808
        %v2577 = vunpack.c.0.s8 %v2576
        %v2578 = vlaneseq
        %v2579 = vshrl.u32 %v2578, 7
        %v2580 = vsub.s32 %v2577, %v2579
        %v2581 = vrot.slane %v2573, %v2580
        %v2583 = vunpack.c.l.s4 1983009808
        %v2584 = vunpack.c.0.s8 %v2583
        %v2585 = vlaneseq
        %v2586 = vshrl.u32 %v2585, 7
        %v2587 = vsub.s32 %v2584, %v2586
        %v2588 = vrot.slane %v2574, %v2587
        %v2589 = vcombine.low %v2476, %v2568
        %v2590 = vcombine.high %v2476, %v2568
        %v2592 = vunpack.c.l.s4 1983009808
        %v2593 = vunpack.c.0.s8 %v2592
        %v2594 = vlaneseq
        %v2595 = vshrl.u32 %v2594, 7
        %v2596 = vsub.s32 %v2593, %v2595
        %v2597 = vrot.slane %v2589, %v2596
        %v2599 = vunpack.c.l.s4 1983009808
        %v2600 = vunpack.c.0.s8 %v2599
        %v2601 = vlaneseq
        %v2602 = vshrl.u32 %v2601, 7
        %v2603 = vsub.s32 %v2600, %v2602
        %v2604 = vrot.slane %v2590, %v2603
        %v2605 = vcombine.low %v2581, %v2597
        %v2606 = vcombine.high %v2581, %v2597
        %v2608 = vunpack.c.l.s4 1934713408
        %v2609 = vunpack.c.0.s8 %v2608
        %v2610 = vlaneseq
        %v2611 = vshrl.u32 %v2610, 7
        %v2612 = vsub.s32 %v2609, %v2611
        %v2613 = vrot.slane %v2605, %v2612
        %v2615 = vunpack.c.l.s4 1934713408
        %v2616 = vunpack.c.0.s8 %v2615
        %v2617 = vlaneseq
        %v2618 = vshrl.u32 %v2617, 7
        %v2619 = vsub.s32 %v2616, %v2618
        %v2620 = vrot.slane %v2606, %v2619
        %v2621 = vcombine.low %v2588, %v2604
        %v2622 = vcombine.high %v2588, %v2604
        %v2624 = vunpack.c.l.s4 1934713408
        %v2625 = vunpack.c.0.s8 %v2624
        %v2626 = vlaneseq
        %v2627 = vshrl.u32 %v2626, 7
        %v2628 = vsub.s32 %v2625, %v2627
        %v2629 = vrot.slane %v2621, %v2628
        %v2631 = vunpack.c.l.s4 1934713408
        %v2632 = vunpack.c.0.s8 %v2631
        %v2633 = vlaneseq
        %v2634 = vshrl.u32 %v2633, 7
        %v2635 = vsub.s32 %v2632, %v2634
        %v2636 = vrot.slane %v2622, %v2635
        %v2637 = vcombine.high %v2613, 0.0
        %v2638 = vcombine.high %v2620, 0.0
        %v2639 = vcombine.high %v2629, 0.0
        %v2640 = vcombine.high %v2636, 0.0
        %v2641 = vcombine.low %v2613, %v2620
        %v2643 = vunpack.c.l.s4 1983009808
        %v2644 = vunpack.c.0.s8 %v2643
        %v2645 = vlaneseq
        %v2646 = vshrl.u32 %v2645, 7
        %v2647 = vsub.s32 %v2644, %v2646
        %v2648 = vrot.slane %v2641, %v2647
        %v2649 = vcombine.low %v2637, %v2638
        %v2651 = vunpack.c.l.s4 1983009808
        %v2652 = vunpack.c.0.s8 %v2651
        %v2653 = vlaneseq
        %v2654 = vshrl.u32 %v2653, 7
        %v2655 = vsub.s32 %v2652, %v2654
        %v2656 = vrot.slane %v2649, %v2655
        %v2657 = vcombine.low %v2629, %v2636
        %v2659 = vunpack.c.l.s4 1983009808
        %v2660 = vunpack.c.0.s8 %v2659
        %v2661 = vlaneseq
        %v2662 = vshrl.u32 %v2661, 7
        %v2663 = vsub.s32 %v2660, %v2662
        %v2664 = vrot.slane %v2657, %v2663
        %v2665 = vcombine.low %v2639, %v2640
        %v2667 = vunpack.c.l.s4 1983009808
        %v2668 = vunpack.c.0.s8 %v2667
        %v2669 = vlaneseq
        %v2670 = vshrl.u32 %v2669, 7
        %v2671 = vsub.s32 %v2668, %v2670
        %v2672 = vrot.slane %v2665, %v2671
        %v2673 = vcombine.low %v2648, %v2656
        %v2674 = vcombine.high %v2648, %v2656
        %v2676 = vunpack.c.l.s4 1934713408
        %v2677 = vunpack.c.0.s8 %v2676
        %v2678 = vlaneseq
        %v2679 = vshrl.u32 %v2678, 7
        %v2680 = vsub.s32 %v2677, %v2679
        %v2681 = vrot.slane %v2673, %v2680
        %v2683 = vunpack.c.l.s4 1934713408
        %v2684 = vunpack.c.0.s8 %v2683
        %v2685 = vlaneseq
        %v2686 = vshrl.u32 %v2685, 7
        %v2687 = vsub.s32 %v2684, %v2686
        %v2688 = vrot.slane %v2674, %v2687
        %v2689 = vcombine.low %v2664, %v2672
        %v2690 = vcombine.high %v2664, %v2672
        %v2692 = vunpack.c.l.s4 1934713408
        %v2693 = vunpack.c.0.s8 %v2692
        %v2694 = vlaneseq
        %v2695 = vshrl.u32 %v2694, 7
        %v2696 = vsub.s32 %v2693, %v2695
        %v2697 = vrot.slane %v2689, %v2696
        %v2699 = vunpack.c.l.s4 1934713408
        %v2700 = vunpack.c.0.s8 %v2699
        %v2701 = vlaneseq
        %v2702 = vshrl.u32 %v2701, 7
        %v2703 = vsub.s32 %v2700, %v2702
        %v2704 = vrot.slane %v2690, %v2703
        %v2705 = vcombine.low %v2681, %v2697
        %v2706 = vcombine.high %v2681, %v2697
        %v2707 = vcombine.low %v2688, %v2704
        %v2708 = vcombine.high %v2688, %v2704
        %2710 = vrot.lane.b32.xlu0 %v2706, 8
        %v2711 = vpop.permute.xlu0 %2710
        %2714 = vrot.lane.b32.xlu0 %v2707, 16
        %v2715 = vpop.permute.xlu0 %2714
        %2718 = vrot.lane.b32.xlu0 %v2708, 24
        %v2719 = vpop.permute.xlu0 %2718
        %v2721 = vsel %vm873, %v2705, %v2711
        %v2722 = vsel %vm1440, %v2721, %v2715
        %v2723 = vsel %vm1442, %v2722, %v2719
        %v2724 = vpack.c.bf16 %v2723, %v2723
        %v2726 = vsel %vm375, %v2724, 0
        %2728 = vmatprep.subr.bf16.mxu0 0
        %2729 = vmatpush1.bf16.msra.mxu0 %v1453
        %2730 = vmatprep.subr.bf16.mxu0 0
        %2731 = vmatpush1.bf16.msra.mxu0 %v1454
        %2732 = vmatprep.subr.bf16.mxu0 0
        %2733 = vmatpush1.bf16.msra.mxu0 0
        %2734 = vmatprep.subr.bf16.mxu0 0
        %2735 = vmatpush1.bf16.msra.mxu0 0
        %2736 = vmatprep.subr.bf16.mxu0 0
        %2737 = vmatpush1.bf16.msra.mxu0 0
        %2738 = vmatprep.subr.bf16.mxu0 0
        %2739 = vmatpush1.bf16.msra.mxu0 0
        %2740 = vmatprep.subr.bf16.mxu0 0
        %2741 = vmatpush1.bf16.msra.mxu0 0
        %2742 = vmatprep.subr.bf16.mxu0 0
        %2743 = vmatpush1.bf16.msra.mxu0 0
        %2744 = vmatprep.subr.bf16.mxu0 0
        %2745 = vmatpush1.bf16.msra.mxu0 0
        %2746 = vmatprep.subr.bf16.mxu0 0
        %2747 = vmatpush1.bf16.msra.mxu0 0
        %2748 = vmatprep.subr.bf16.mxu0 0
        %2749 = vmatpush1.bf16.msra.mxu0 0
        %2750 = vmatprep.subr.bf16.mxu0 0
        %2751 = vmatpush1.bf16.msra.mxu0 0
        %2752 = vmatprep.subr.bf16.mxu0 0
        %2753 = vmatpush1.bf16.msra.mxu0 0
        %2754 = vmatprep.subr.bf16.mxu0 0
        %2755 = vmatpush1.bf16.msra.mxu0 0
        %2756 = vmatprep.subr.bf16.mxu0 0
        %2757 = vmatpush1.bf16.msra.mxu0 0
        %2758 = vmatprep.subr.bf16.mxu0 0
        %2759 = vmatpush1.bf16.msra.mxu0 0
        %2760 = vmatprep.mubr.bf16.mxu0 0
        %2761 = vmatmul.mubr.bf16.gmra.mrb[0].mxu0 %v2726
        %v2762 = vpop.f32.mrb[0].mxu0
        %v2763 = vadd.f32 %v341, %v2762
        %v2764 = vpop.f32.mrb[0].mxu0
        %v2765 = vpop.f32.mrb[0].mxu0
        %v2766 = vpop.f32.mrb[0].mxu0
        %2767 = vdwg.mxu0
        %v2768 = vadd.f32 %v1658, %v2763
        %v2769 = vsel %vm375, %v2768, 0.0
        %2770 = vadd.xlane.f32.xlu0 %v2769
        %v2771 = vpop.xlane.xlu0 %2770
        %v2772 = vmul.f32 %v2771, %v1504
        %v2773 = vsub.f32 %v2768, %v2772
        %v2774 = vmul.f32 %v2773, %v2773
        %v2775 = vsel %vm375, %v2774, 0.0
        %2776 = vadd.xlane.f32.xlu0 %v2775
        %v2777 = vpop.xlane.xlu0 %2776
        %v2778 = vmul.f32 %v2777, %v1504
        %v2779 = vadd.f32 %v2778, 1e-05
        %v2780 = vrsqrt.pop %v2779
        %v2781 = vmul.f32 %v2773, %v2780
        %v2782 = vmul.f32 %v2781, %v349
        %v2783 = vadd.f32 %v2782, %v353
        %v2784 = vpack.c.bf16 %v2783, %v2783
        %v2786 = vsel %vm375, %v2784, 0
        %2788 = vmatprep.subr.bf16.mxu0 0
        %2789 = vmatpush1.bf16.msra.mxu0 %v1526
        %2790 = vmatprep.subr.bf16.mxu0 0
        %2791 = vmatpush1.bf16.msra.mxu0 %v1527
        %2792 = vmatprep.subr.bf16.mxu0 0
        %2793 = vmatpush1.bf16.msra.mxu0 0
        %2794 = vmatprep.subr.bf16.mxu0 0
        %2795 = vmatpush1.bf16.msra.mxu0 0
        %2796 = vmatprep.subr.bf16.mxu0 0
        %2797 = vmatpush1.bf16.msra.mxu0 0
        %2798 = vmatprep.subr.bf16.mxu0 0
        %2799 = vmatpush1.bf16.msra.mxu0 0
        %2800 = vmatprep.subr.bf16.mxu0 0
        %2801 = vmatpush1.bf16.msra.mxu0 0
        %2802 = vmatprep.subr.bf16.mxu0 0
        %2803 = vmatpush1.bf16.msra.mxu0 0
        %2804 = vmatprep.subr.bf16.mxu0 0
        %2805 = vmatpush1.bf16.msra.mxu0 0
        %2806 = vmatprep.subr.bf16.mxu0 0
        %2807 = vmatpush1.bf16.msra.mxu0 0
        %2808 = vmatprep.subr.bf16.mxu0 0
        %2809 = vmatpush1.bf16.msra.mxu0 0
        %2810 = vmatprep.subr.bf16.mxu0 0
        %2811 = vmatpush1.bf16.msra.mxu0 0
        %2812 = vmatprep.subr.bf16.mxu0 0
        %2813 = vmatpush1.bf16.msra.mxu0 0
        %2814 = vmatprep.subr.bf16.mxu0 0
        %2815 = vmatpush1.bf16.msra.mxu0 0
        %2816 = vmatprep.subr.bf16.mxu0 0
        %2817 = vmatpush1.bf16.msra.mxu0 0
        %2818 = vmatprep.subr.bf16.mxu0 0
        %2819 = vmatpush1.bf16.msra.mxu0 0
        %2820 = vmatprep.mubr.bf16.mxu0 0
        %2821 = vmatmul.mubr.bf16.gmra.mrb[0].mxu0 %v2786
        %v2822 = vpop.f32.mrb[0].mxu0
        %v2823 = vadd.f32 %v335, %v2822
        %v2824 = vpop.f32.mrb[0].mxu0
        %v2825 = vpop.f32.mrb[0].mxu0
        %v2826 = vpop.f32.mrb[0].mxu0
        %2827 = vdwg.mxu0
        %v2828 = vmax.f32 %v2823, 0.0
        %v2829 = vpack.c.bf16 %v2828, %v2828
        %v2831 = vsel %vm1599, %v2829, 0
        %2833 = vmatprep.subr.bf16.mxu0 0
        %2834 = vmatpush1.bf16.msra.mxu0 %v1591
        %2835 = vmatprep.subr.bf16.mxu0 0
        %2836 = vmatpush1.bf16.msra.mxu0 %v1592
        %2837 = vmatprep.subr.bf16.mxu0 0
        %2838 = vmatpush1.bf16.msra.mxu0 %v1593
        %2839 = vmatprep.subr.bf16.mxu0 0
        %2840 = vmatpush1.bf16.msra.mxu0 %v1594
        %2841 = vmatprep.subr.bf16.mxu0 0
        %2842 = vmatpush1.bf16.msra.mxu0 0
        %2843 = vmatprep.subr.bf16.mxu0 0
        %2844 = vmatpush1.bf16.msra.mxu0 0
        %2845 = vmatprep.subr.bf16.mxu0 0
        %2846 = vmatpush1.bf16.msra.mxu0 0
        %2847 = vmatprep.subr.bf16.mxu0 0
        %2848 = vmatpush1.bf16.msra.mxu0 0
        %2849 = vmatprep.subr.bf16.mxu0 0
        %2850 = vmatpush1.bf16.msra.mxu0 0
        %2851 = vmatprep.subr.bf16.mxu0 0
        %2852 = vmatpush1.bf16.msra.mxu0 0
        %2853 = vmatprep.subr.bf16.mxu0 0
        %2854 = vmatpush1.bf16.msra.mxu0 0
        %2855 = vmatprep.subr.bf16.mxu0 0
        %2856 = vmatpush1.bf16.msra.mxu0 0
        %2857 = vmatprep.subr.bf16.mxu0 0
        %2858 = vmatpush1.bf16.msra.mxu0 0
        %2859 = vmatprep.subr.bf16.mxu0 0
        %2860 = vmatpush1.bf16.msra.mxu0 0
        %2861 = vmatprep.subr.bf16.mxu0 0
        %2862 = vmatpush1.bf16.msra.mxu0 0
        %2863 = vmatprep.subr.bf16.mxu0 0
        %2864 = vmatpush1.bf16.msra.mxu0 0
        %2865 = vmatprep.mubr.bf16.mxu0 0
        %2866 = vmatmul.mubr.bf16.gmra.mrb[0].mxu0 %v2831
        %v2867 = vpop.f32.mrb[0].mxu0
        %v2868 = vadd.f32 %v345, %v2867
        %v2869 = vpop.f32.mrb[0].mxu0
        %v2870 = vpop.f32.mrb[0].mxu0
        %v2871 = vpop.f32.mrb[0].mxu0
        %2872 = vdwg.mxu0
        %v2873 = vadd.f32 %v2783, %v2868
        %v2874 = vsel %vm375, %v2873, 0.0
        %2875 = vadd.xlane.f32.xlu0 %v2874
        %v2876 = vpop.xlane.xlu0 %2875
        %v2877 = vmul.f32 %v2876, %v1504
        %v2878 = vsub.f32 %v2873, %v2877
        %v2879 = vmul.f32 %v2878, %v2878
        %v2880 = vsel %vm375, %v2879, 0.0
        %2881 = vadd.xlane.f32.xlu0 %v2880
        %v2882 = vpop.xlane.xlu0 %2881
        %v2883 = vmul.f32 %v2882, %v1504
        %v2884 = vadd.f32 %v2883, 1e-05
        %v2885 = vrsqrt.pop %v2884
        %v2886 = vmul.f32 %v2878, %v2885
        %v2887 = vmul.f32 %v2886, %v357
        %v2888 = vadd.f32 %v2887, %v361
        %2889 = vst.msk [vmem:[%s296] sm:$0xff] %vm375, %v2888
        %s2890 = sand.u32 %s203, 1
        %s2891 = scalar_lea.sflag [#allocation3], %s2890
        %s2892 = sand.u32 %s203, 1
        %s2893 = smul.addr %s2892, 8
        %s2894 = scalar_lea.vmem [#allocation2], %s2893
        // Predicated region
        $region53: #{transformer_encoder_pallas.1} parent=51 // pred_check
          %p2895 = pneg %p213
        $region54: #{transformer_encoder_pallas.1} parent=51 // pred_check_branch
          %2897 = sbr.rel (%p2895) target = $region56
        $region55: #{transformer_encoder_pallas.1} parent=51 // pred_region
          %s2899 = ssub.s32 128, 128
          %2900 = vsyncadd %s2891, %s2899
          %s2901 = smul.addr %s22, 128
          %s2902 = scalar_lea.hbm %s8, %s2901
          %s2904 = sshll.u32 %s2894, 4
          %s2905 = int_to_ptr.vmem [resolvable:$true] %s2904
          %2907 = dma.vmem_to_hbm [thread:$0]  %s2905, 128, %s2902, %s2891
        $region56: #{transformer_encoder_pallas.1} parent=51 // pred_fallthru
          _
      $region52: #{transformer_encoder_pallas.1} parent=5 // pred_fallthru
        _
      %p2908 = scmp.le.s32.totalorder 2, %s17
      // Predicated region
      $region57: #{transformer_encoder_pallas.1} parent=5 // pred_check
        %p2909 = pneg %p2908
      $region58: #{transformer_encoder_pallas.1} parent=5 // pred_check_branch
        %2911 = sbr.rel (%p2909) target = $region60
      $region59: #{transformer_encoder_pallas.1} parent=5 // pred_region
        %s2912 = ssub.s32 %s17, 2
        // Predicated region
        $region61: #{transformer_encoder_pallas.1} parent=59 // pred_check
          %p2913 = pneg %p219
        $region62: #{transformer_encoder_pallas.1} parent=59 // pred_check_branch
          %2915 = sbr.rel (%p2913) target = $region64
        $region63: #{transformer_encoder_pallas.1} parent=59 // pred_region
          %s2916 = sand.u32 %s204, 1
          %s2917 = scalar_lea.sflag [#allocation3], %s2916
          %s2918 = sand.u32 %s204, 1
          %s2919 = smul.addr %s2918, 8
          %s2920 = scalar_lea.vmem [#allocation2], %s2919
          %2921 = dma.done %s2917, 128
        $region64: #{transformer_encoder_pallas.1} parent=59 // pred_fallthru
          _
      $region60: #{transformer_encoder_pallas.1} parent=5 // pred_fallthru
        _
    $region6: #{transformer_encoder_pallas.1} parent=1 // loop_footer
      %s21 = sadd.s32 1, %s17
    $region7: #{transformer_encoder_pallas.1} parent=1 // loop_footer_branch
      %16 = sbr.rel target = $region3
    $region8: #{transformer_encoder_pallas.1} parent=1 // loop_exit
      _
    %2922 = vsyncpa [#allocation3], 1
    %s2923 = scalar_lea.sflag [#allocation3], 1
    %2924 = vsyncpa %s2923, 1

</llo_original>
